<compile_context>
chip_gen: v6e
topology: v6e:2x2x1
jax: 0.10.0
libtpu: 0.0.40
codegen_flags: <defaults>
</compile_context>

<pallas_src>
import jax
import jax.numpy as jnp
from jax import lax
from jax.experimental import pallas as pl
from jax.experimental.pallas import tpu as pltpu

N_ITERS = 500          # outer accelerated projected-gradient iterations
N_BISECT_ITERS = 30    # bisection steps (f32 bracket is exhausted by ~30)


def _project_simplex(v):
    """Project each row of v (TB, N) onto {w : sum(w)=1, w>=0}.

    Finds tau_b with sum(relu(v_b - tau_b)) == 1 by bisection; all TB rows are
    bisected in lockstep via keepdims reductions over the last axis."""
    lo = jnp.min(v, axis=-1, keepdims=True) - 1.0      # (TB, 1)
    hi = jnp.max(v, axis=-1, keepdims=True)            # (TB, 1)

    def body(_, carry):
        lo, hi = carry
        mid = 0.5 * (lo + hi)
        s = jnp.sum(jnp.maximum(v - mid, 0.0), axis=-1, keepdims=True)
        gt = s > 1.0
        return jnp.where(gt, mid, lo), jnp.where(gt, hi, mid)

    lo, hi = lax.fori_loop(0, N_BISECT_ITERS, body, (lo, hi), unroll=True)
    return jnp.maximum(v - 0.5 * (lo + hi), 0.0)


def qp_kernel(mu_ref, sigma_ref, w_ref):
    mu = mu_ref[...]           # (TB, N)
    S = sigma_ref[...]         # (TB, N, N), symmetric
    TB, N = mu.shape

    # Per-problem step 1/L with L = 2*||S||_inf >= 2*lambda_max(S) (safe bound).
    L = 2.0 * jnp.max(jnp.sum(jnp.abs(S), axis=-1), axis=-1, keepdims=True) + 1e-6
    step = 1.0 / L             # (TB, 1)

    # Hoisted loop-invariant algebra:  y - step*(2*S@y - mu) == A @ y + b.
    row = lax.broadcasted_iota(jnp.int32, (N, N), 0)
    col = lax.broadcasted_iota(jnp.int32, (N, N), 1)
    eye = (row == col).astype(jnp.float32)
    A = eye[None, :, :] - (2.0 * step)[:, :, None] * S   # (TB, N, N), symmetric
    b = step * mu                                        # (TB, N)

    w0 = jnp.full((TB, N), 1.0 / N, dtype=jnp.float32)
    t0 = jnp.ones((1, 1), dtype=jnp.float32)             # vector-shaped FISTA t

    def fista(_, carry):
        w_prev, y, t = carry
        # Tiny batched mat-vec on VPU/XLU (no MXU): v[b,m] = sum_n A[b,m,n]*y[b,n]
        v = jnp.sum(y[:, None, :] * A, axis=-1) + b       # (TB, N)
        w = _project_simplex(v)
        t_new = 0.5 * (1.0 + jnp.sqrt(1.0 + 4.0 * t * t))
        beta = (t - 1.0) / t_new                          # (1, 1)
        y_new = w + beta * (w - w_prev)
        return w, y_new, t_new

    w, _, _ = lax.fori_loop(0, N_ITERS, fista, (w0, w0, t0))
    w_ref[...] = w


def qp_layer(mu, Sigma):
    """mu: (B, N), Sigma: (B, N, N) -> optimal weights (B, N)."""
    B, N = mu.shape
    Sigma_sym = (0.5 * (Sigma + jnp.swapaxes(Sigma, -1, -2))).astype(jnp.float32)
    mu_f = mu.astype(jnp.float32)

    # Pack up to 8 problems per grid step (batch on sublanes, assets on lanes)
    # so the serial bisection chain is amortized across the whole block.
    if B <= 8:
        TB, B_pad = B, B
    else:
        TB = 8
        B_pad = ((B + TB - 1) // TB) * TB
    if B_pad != B:
        pad = B_pad - B
        mu_f = jnp.concatenate([mu_f, jnp.zeros((pad, N), jnp.float32)], axis=0)
        eye_pad = jnp.broadcast_to(jnp.eye(N, dtype=jnp.float32), (pad, N, N))
        Sigma_sym = jnp.concatenate([Sigma_sym, eye_pad], axis=0)

    w = pl.pallas_call(
        qp_kernel,
        out_shape=jax.ShapeDtypeStruct((B_pad, N), jnp.float32),
        grid_spec=pltpu.PrefetchScalarGridSpec(
            num_scalar_prefetch=0,
            grid=(B_pad // TB,),
            in_specs=[
                pl.BlockSpec((TB, N), lambda i: (i, 0)),
                pl.BlockSpec((TB, N, N), lambda i: (i, 0, 0)),
            ],
            out_specs=pl.BlockSpec((TB, N), lambda i: (i, 0)),
        ),
        compiler_params=pltpu.CompilerParams(
            dimension_semantics=("parallel",)),
    )(mu_f, Sigma_sym)
    return w[:B]


def _reference_qp(mu, Sigma):
    """Pure-JAX reference: identical FISTA math, used to validate the kernel."""
    Sigma = 0.5 * (Sigma + jnp.swapaxes(Sigma, -1, -2))
    Sigma = Sigma.astype(jnp.float32)
    mu = mu.astype(jnp.float32)

    def solve_one(mu_i, S_i):
        n = mu_i.shape[0]
        L = 2.0 * jnp.max(jnp.sum(jnp.abs(S_i), axis=-1)) + 1e-6
        step = 1.0 / L
        A = jnp.eye(n, dtype=jnp.float32) - 2.0 * step * S_i
        b = step * mu_i

        def proj(v):
            lo = jnp.min(v) - 1.0
            hi = jnp.max(v)

            def body(_, carry):
                lo, hi = carry
                mid = 0.5 * (lo + hi)
                s = jnp.sum(jnp.maximum(v - mid, 0.0))
                return (jnp.where(s > 1.0, mid, lo), jnp.where(s > 1.0, hi, mid))

            lo, hi = lax.fori_loop(0, N_BISECT_ITERS, body, (lo, hi))
            return jnp.maximum(v - 0.5 * (lo + hi), 0.0)

        w0 = jnp.full((n,), 1.0 / n, jnp.float32)

        def fista(_, carry):
            w_prev, y, t = carry
            v = A @ y + b
            w = proj(v)
            t_new = 0.5 * (1.0 + jnp.sqrt(1.0 + 4.0 * t * t))
            y_new = w + ((t - 1.0) / t_new) * (w - w_prev)
            return w, y_new, t_new

        w, _, _ = lax.fori_loop(0, N_ITERS, fista, (w0, w0, jnp.float32(1.0)))
        return w

    return jax.vmap(solve_one)(mu, Sigma)


if __name__ == "__main__":
    key = jax.random.PRNGKey(0)
    B, N = 2, 8  # batch of problems, n_assets = 8

    k_mu, k_A = jax.random.split(key)
    mu = jax.random.normal(k_mu, (B, N), dtype=jnp.float32) * 0.1
    A = jax.random.normal(k_A, (B, N, N), dtype=jnp.float32) * 0.3
    # PSD covariance: A A^T + eps I
    Sigma = jnp.einsum("bij,bkj->bik", A, A) + 0.05 * jnp.eye(N)[None]

    w = jax.block_until_ready(qp_layer(mu, Sigma))
    w_ref = jax.block_until_ready(_reference_qp(mu, Sigma))

    # Sanity checks: feasibility + match against pure-JAX reference solver.
    assert jnp.all(jnp.abs(jnp.sum(w, axis=-1) - 1.0) < 1e-4), "sum(w) != 1"
    assert jnp.all(w >= -1e-5), "w has negative entries"
    assert jnp.max(jnp.abs(w - w_ref)) < 2e-4, "kernel mismatch vs reference"

    print("KERNEL_OK")
</pallas_src>

<mosaic_0001>
module attributes {stable_mosaic.version = 11 : i64} {
  func.func @qp_kernel(%arg0: i32, %arg1: memref<2x8xf32, #tpu.memory_space<vmem>>, %arg2: memref<2x8x8xf32, #tpu.memory_space<vmem>>, %arg3: memref<2x8xf32, #tpu.memory_space<vmem>>) attributes {dimension_semantics = [#tpu.dimension_semantics<parallel>], iteration_bounds = array<i64: 1>, scalar_prefetch = 0 : i64, scratch_operands = 0 : i64, tpu.core_type = #tpu.core_type<tc>, window_params = [{transform_indices = @transform_0, window_bounds = array<i64: 2, 8>}, {transform_indices = @transform_1, window_bounds = array<i64: 2, 8, 8>}, {transform_indices = @transform_2, window_bounds = array<i64: 2, 8>}]} {
    %c0 = arith.constant 0 : index
    %c0_0 = arith.constant 0 : index
    %0 = vector.load %arg1[%c0, %c0_0] : memref<2x8xf32, #tpu.memory_space<vmem>>, vector<2x8xf32>
    %c0_1 = arith.constant 0 : index
    %c0_2 = arith.constant 0 : index
    %c0_3 = arith.constant 0 : index
    %1 = vector.load %arg2[%c0_1, %c0_2, %c0_3] : memref<2x8x8xf32, #tpu.memory_space<vmem>>, vector<2x8x8xf32>
    %2 = math.absf %1 : vector<2x8x8xf32>
    %cst = arith.constant dense<0.000000e+00> : vector<2x8xf32>
    %3 = vector.multi_reduction <add>, %2, %cst [2] : vector<2x8x8xf32> to vector<2x8xf32>
    %cst_4 = arith.constant dense<0xFF800000> : vector<2xf32>
    %4 = vector.multi_reduction <maximumf>, %3, %cst_4 [1] : vector<2x8xf32> to vector<2xf32>
    %5 = vector.shape_cast %4 : vector<2xf32> to vector<2x1xf32>
    %cst_5 = arith.constant 2.000000e+00 : f32
    %6 = vector.broadcast %cst_5 : f32 to vector<2x1xf32>
    %7 = arith.mulf %6, %5 : vector<2x1xf32>
    %cst_6 = arith.constant 9.99999997E-7 : f32
    %8 = vector.broadcast %cst_6 : f32 to vector<2x1xf32>
    %9 = arith.addf %7, %8 : vector<2x1xf32>
    %cst_7 = arith.constant 1.000000e+00 : f32
    %10 = vector.broadcast %cst_7 : f32 to vector<2x1xf32>
    %11 = arith.divf %10, %9 : vector<2x1xf32>
    %12 = tpu.iota {dimensions = array<i32: 0>} : vector<8x8xi32>
    %13 = tpu.iota {dimensions = array<i32: 1>} : vector<8x8xi32>
    %14 = arith.cmpi eq, %12, %13 : vector<8x8xi32>
    %15 = arith.extui %14 : vector<8x8xi1> to vector<8x8xi32>
    %16 = arith.sitofp %15 : vector<8x8xi32> to vector<8x8xf32>
    %17 = vector.shape_cast %16 : vector<8x8xf32> to vector<1x8x8xf32>
    %cst_8 = arith.constant 2.000000e+00 : f32
    %18 = vector.broadcast %cst_8 : f32 to vector<2x1xf32>
    %19 = arith.mulf %18, %11 : vector<2x1xf32>
    %20 = vector.shape_cast %19 : vector<2x1xf32> to vector<2x1x1xf32>
    %21 = vector.broadcast %20 : vector<2x1x1xf32> to vector<2x8x8xf32>
    %22 = arith.mulf %21, %1 : vector<2x8x8xf32>
    %23 = vector.broadcast %17 : vector<1x8x8xf32> to vector<2x8x8xf32>
    %24 = arith.subf %23, %22 : vector<2x8x8xf32>
    %25 = vector.broadcast %11 : vector<2x1xf32> to vector<2x8xf32>
    %26 = arith.mulf %25, %0 : vector<2x8xf32>
    %cst_9 = arith.constant 1.250000e-01 : f32
    %27 = vector.broadcast %cst_9 : f32 to vector<2x8xf32>
    %cst_10 = arith.constant 1.000000e+00 : f32
    %28 = vector.broadcast %cst_10 : f32 to vector<1x1xf32>
    %c0_i32 = arith.constant 0 : i32
    %c500_i32 = arith.constant 500 : i32
    %29 = arith.addi %c0_i32, %c500_i32 : i32
    %c1_i32 = arith.constant 1 : i32
    %30:3 = scf.for %arg4 = %c0_i32 to %29 step %c1_i32 iter_args(%arg5 = %27, %arg6 = %27, %arg7 = %28) -> (vector<2x8xf32>, vector<2x8xf32>, vector<1x1xf32>)  : i32 {
      %32 = vector.shape_cast %arg6 : vector<2x8xf32> to vector<2x1x8xf32>
      %33 = vector.broadcast %32 : vector<2x1x8xf32> to vector<2x8x8xf32>
      %34 = arith.mulf %33, %24 : vector<2x8x8xf32>
      %cst_13 = arith.constant dense<0.000000e+00> : vector<2x8xf32>
      %35 = vector.multi_reduction <add>, %34, %cst_13 [2] : vector<2x8x8xf32> to vector<2x8xf32>
      %36 = arith.addf %35, %26 : vector<2x8xf32>
      %cst_14 = arith.constant dense<0x7F800000> : vector<2xf32>
      %37 = vector.multi_reduction <minimumf>, %36, %cst_14 [1] : vector<2x8xf32> to vector<2xf32>
      %38 = vector.shape_cast %37 : vector<2xf32> to vector<2x1xf32>
      %cst_15 = arith.constant 1.000000e+00 : f32
      %39 = vector.broadcast %cst_15 : f32 to vector<2x1xf32>
      %40 = arith.subf %38, %39 : vector<2x1xf32>
      %cst_16 = arith.constant dense<0xFF800000> : vector<2xf32>
      %41 = vector.multi_reduction <maximumf>, %36, %cst_16 [1] : vector<2x8xf32> to vector<2xf32>
      %42 = vector.shape_cast %41 : vector<2xf32> to vector<2x1xf32>
      %c0_i32_17 = arith.constant 0 : i32
      %43 = arith.addf %40, %42 : vector<2x1xf32>
      %cst_18 = arith.constant 5.000000e-01 : f32
      %44 = vector.broadcast %cst_18 : f32 to vector<2x1xf32>
      %45 = arith.mulf %44, %43 : vector<2x1xf32>
      %46 = vector.broadcast %45 : vector<2x1xf32> to vector<2x8xf32>
      %47 = arith.subf %36, %46 : vector<2x8xf32>
      %cst_19 = arith.constant 0.000000e+00 : f32
      %48 = vector.broadcast %cst_19 : f32 to vector<2x8xf32>
      %49 = arith.maximumf %47, %48 : vector<2x8xf32>
      %cst_20 = arith.constant dense<0.000000e+00> : vector<2xf32>
      %50 = vector.multi_reduction <add>, %49, %cst_20 [1] : vector<2x8xf32> to vector<2xf32>
      %51 = vector.shape_cast %50 : vector<2xf32> to vector<2x1xf32>
      %cst_21 = arith.constant 1.000000e+00 : f32
      %52 = vector.broadcast %cst_21 : f32 to vector<2x1xf32>
      %53 = arith.cmpf ogt, %51, %52 : vector<2x1xf32>
      %54 = arith.select %53, %45, %40 : vector<2x1xi1>, vector<2x1xf32>
      %55 = arith.select %53, %42, %45 : vector<2x1xi1>, vector<2x1xf32>
      %c1_i32_22 = arith.constant 1 : i32
      %56 = arith.addf %54, %55 : vector<2x1xf32>
      %cst_23 = arith.constant 5.000000e-01 : f32
      %57 = vector.broadcast %cst_23 : f32 to vector<2x1xf32>
      %58 = arith.mulf %57, %56 : vector<2x1xf32>
      %59 = vector.broadcast %58 : vector<2x1xf32> to vector<2x8xf32>
      %60 = arith.subf %36, %59 : vector<2x8xf32>
      %cst_24 = arith.constant 0.000000e+00 : f32
      %61 = vector.broadcast %cst_24 : f32 to vector<2x8xf32>
      %62 = arith.maximumf %60, %61 : vector<2x8xf32>
      %cst_25 = arith.constant dense<0.000000e+00> : vector<2xf32>
      %63 = vector.multi_reduction <add>, %62, %cst_25 [1] : vector<2x8xf32> to vector<2xf32>
      %64 = vector.shape_cast %63 : vector<2xf32> to vector<2x1xf32>
      %cst_26 = arith.constant 1.000000e+00 : f32
      %65 = vector.broadcast %cst_26 : f32 to vector<2x1xf32>
      %66 = arith.cmpf ogt, %64, %65 : vector<2x1xf32>
      %67 = arith.select %66, %58, %54 : vector<2x1xi1>, vector<2x1xf32>
      %68 = arith.select %66, %55, %58 : vector<2x1xi1>, vector<2x1xf32>
      %c2_i32 = arith.constant 2 : i32
      %69 = arith.addf %67, %68 : vector<2x1xf32>
      %cst_27 = arith.constant 5.000000e-01 : f32
      %70 = vector.broadcast %cst_27 : f32 to vector<2x1xf32>
      %71 = arith.mulf %70, %69 : vector<2x1xf32>
      %72 = vector.broadcast %71 : vector<2x1xf32> to vector<2x8xf32>
      %73 = arith.subf %36, %72 : vector<2x8xf32>
      %cst_28 = arith.constant 0.000000e+00 : f32
      %74 = vector.broadcast %cst_28 : f32 to vector<2x8xf32>
      %75 = arith.maximumf %73, %74 : vector<2x8xf32>
      %cst_29 = arith.constant dense<0.000000e+00> : vector<2xf32>
      %76 = vector.multi_reduction <add>, %75, %cst_29 [1] : vector<2x8xf32> to vector<2xf32>
      %77 = vector.shape_cast %76 : vector<2xf32> to vector<2x1xf32>
      %cst_30 = arith.constant 1.000000e+00 : f32
      %78 = vector.broadcast %cst_30 : f32 to vector<2x1xf32>
      %79 = arith.cmpf ogt, %77, %78 : vector<2x1xf32>
      %80 = arith.select %79, %71, %67 : vector<2x1xi1>, vector<2x1xf32>
      %81 = arith.select %79, %68, %71 : vector<2x1xi1>, vector<2x1xf32>
      %c3_i32 = arith.constant 3 : i32
      %82 = arith.addf %80, %81 : vector<2x1xf32>
      %cst_31 = arith.constant 5.000000e-01 : f32
      %83 = vector.broadcast %cst_31 : f32 to vector<2x1xf32>
      %84 = arith.mulf %83, %82 : vector<2x1xf32>
      %85 = vector.broadcast %84 : vector<2x1xf32> to vector<2x8xf32>
      %86 = arith.subf %36, %85 : vector<2x8xf32>
      %cst_32 = arith.constant 0.000000e+00 : f32
      %87 = vector.broadcast %cst_32 : f32 to vector<2x8xf32>
      %88 = arith.maximumf %86, %87 : vector<2x8xf32>
      %cst_33 = arith.constant dense<0.000000e+00> : vector<2xf32>
      %89 = vector.multi_reduction <add>, %88, %cst_33 [1] : vector<2x8xf32> to vector<2xf32>
      %90 = vector.shape_cast %89 : vector<2xf32> to vector<2x1xf32>
      %cst_34 = arith.constant 1.000000e+00 : f32
      %91 = vector.broadcast %cst_34 : f32 to vector<2x1xf32>
      %92 = arith.cmpf ogt, %90, %91 : vector<2x1xf32>
      %93 = arith.select %92, %84, %80 : vector<2x1xi1>, vector<2x1xf32>
      %94 = arith.select %92, %81, %84 : vector<2x1xi1>, vector<2x1xf32>
      %c4_i32 = arith.constant 4 : i32
      %95 = arith.addf %93, %94 : vector<2x1xf32>
      %cst_35 = arith.constant 5.000000e-01 : f32
      %96 = vector.broadcast %cst_35 : f32 to vector<2x1xf32>
      %97 = arith.mulf %96, %95 : vector<2x1xf32>
      %98 = vector.broadcast %97 : vector<2x1xf32> to vector<2x8xf32>
      %99 = arith.subf %36, %98 : vector<2x8xf32>
      %cst_36 = arith.constant 0.000000e+00 : f32
      %100 = vector.broadcast %cst_36 : f32 to vector<2x8xf32>
      %101 = arith.maximumf %99, %100 : vector<2x8xf32>
      %cst_37 = arith.constant dense<0.000000e+00> : vector<2xf32>
      %102 = vector.multi_reduction <add>, %101, %cst_37 [1] : vector<2x8xf32> to vector<2xf32>
      %103 = vector.shape_cast %102 : vector<2xf32> to vector<2x1xf32>
      %cst_38 = arith.constant 1.000000e+00 : f32
      %104 = vector.broadcast %cst_38 : f32 to vector<2x1xf32>
      %105 = arith.cmpf ogt, %103, %104 : vector<2x1xf32>
      %106 = arith.select %105, %97, %93 : vector<2x1xi1>, vector<2x1xf32>
      %107 = arith.select %105, %94, %97 : vector<2x1xi1>, vector<2x1xf32>
      %c5_i32 = arith.constant 5 : i32
      %108 = arith.addf %106, %107 : vector<2x1xf32>
      %cst_39 = arith.constant 5.000000e-01 : f32
      %109 = vector.broadcast %cst_39 : f32 to vector<2x1xf32>
      %110 = arith.mulf %109, %108 : vector<2x1xf32>
      %111 = vector.broadcast %110 : vector<2x1xf32> to vector<2x8xf32>
      %112 = arith.subf %36, %111 : vector<2x8xf32>
      %cst_40 = arith.constant 0.000000e+00 : f32
      %113 = vector.broadcast %cst_40 : f32 to vector<2x8xf32>
      %114 = arith.maximumf %112, %113 : vector<2x8xf32>
      %cst_41 = arith.constant dense<0.000000e+00> : vector<2xf32>
      %115 = vector.multi_reduction <add>, %114, %cst_41 [1] : vector<2x8xf32> to vector<2xf32>
      %116 = vector.shape_cast %115 : vector<2xf32> to vector<2x1xf32>
      %cst_42 = arith.constant 1.000000e+00 : f32
      %117 = vector.broadcast %cst_42 : f32 to vector<2x1xf32>
      %118 = arith.cmpf ogt, %116, %117 : vector<2x1xf32>
      %119 = arith.select %118, %110, %106 : vector<2x1xi1>, vector<2x1xf32>
      %120 = arith.select %118, %107, %110 : vector<2x1xi1>, vector<2x1xf32>
      %c6_i32 = arith.constant 6 : i32
      %121 = arith.addf %119, %120 : vector<2x1xf32>
      %cst_43 = arith.constant 5.000000e-01 : f32
      %122 = vector.broadcast %cst_43 : f32 to vector<2x1xf32>
      %123 = arith.mulf %122, %121 : vector<2x1xf32>
      %124 = vector.broadcast %123 : vector<2x1xf32> to vector<2x8xf32>
      %125 = arith.subf %36, %124 : vector<2x8xf32>
      %cst_44 = arith.constant 0.000000e+00 : f32
      %126 = vector.broadcast %cst_44 : f32 to vector<2x8xf32>
      %127 = arith.maximumf %125, %126 : vector<2x8xf32>
      %cst_45 = arith.constant dense<0.000000e+00> : vector<2xf32>
      %128 = vector.multi_reduction <add>, %127, %cst_45 [1] : vector<2x8xf32> to vector<2xf32>
      %129 = vector.shape_cast %128 : vector<2xf32> to vector<2x1xf32>
      %cst_46 = arith.constant 1.000000e+00 : f32
      %130 = vector.broadcast %cst_46 : f32 to vector<2x1xf32>
      %131 = arith.cmpf ogt, %129, %130 : vector<2x1xf32>
      %132 = arith.select %131, %123, %119 : vector<2x1xi1>, vector<2x1xf32>
      %133 = arith.select %131, %120, %123 : vector<2x1xi1>, vector<2x1xf32>
      %c7_i32 = arith.constant 7 : i32
      %134 = arith.addf %132, %133 : vector<2x1xf32>
      %cst_47 = arith.constant 5.000000e-01 : f32
      %135 = vector.broadcast %cst_47 : f32 to vector<2x1xf32>
      %136 = arith.mulf %135, %134 : vector<2x1xf32>
      %137 = vector.broadcast %136 : vector<2x1xf32> to vector<2x8xf32>
      %138 = arith.subf %36, %137 : vector<2x8xf32>
      %cst_48 = arith.constant 0.000000e+00 : f32
      %139 = vector.broadcast %cst_48 : f32 to vector<2x8xf32>
      %140 = arith.maximumf %138, %139 : vector<2x8xf32>
      %cst_49 = arith.constant dense<0.000000e+00> : vector<2xf32>
      %141 = vector.multi_reduction <add>, %140, %cst_49 [1] : vector<2x8xf32> to vector<2xf32>
      %142 = vector.shape_cast %141 : vector<2xf32> to vector<2x1xf32>
      %cst_50 = arith.constant 1.000000e+00 : f32
      %143 = vector.broadcast %cst_50 : f32 to vector<2x1xf32>
      %144 = arith.cmpf ogt, %142, %143 : vector<2x1xf32>
      %145 = arith.select %144, %136, %132 : vector<2x1xi1>, vector<2x1xf32>
      %146 = arith.select %144, %133, %136 : vector<2x1xi1>, vector<2x1xf32>
      %c8_i32 = arith.constant 8 : i32
      %147 = arith.addf %145, %146 : vector<2x1xf32>
      %cst_51 = arith.constant 5.000000e-01 : f32
      %148 = vector.broadcast %cst_51 : f32 to vector<2x1xf32>
      %149 = arith.mulf %148, %147 : vector<2x1xf32>
      %150 = vector.broadcast %149 : vector<2x1xf32> to vector<2x8xf32>
      %151 = arith.subf %36, %150 : vector<2x8xf32>
      %cst_52 = arith.constant 0.000000e+00 : f32
      %152 = vector.broadcast %cst_52 : f32 to vector<2x8xf32>
      %153 = arith.maximumf %151, %152 : vector<2x8xf32>
      %cst_53 = arith.constant dense<0.000000e+00> : vector<2xf32>
      %154 = vector.multi_reduction <add>, %153, %cst_53 [1] : vector<2x8xf32> to vector<2xf32>
      %155 = vector.shape_cast %154 : vector<2xf32> to vector<2x1xf32>
      %cst_54 = arith.constant 1.000000e+00 : f32
      %156 = vector.broadcast %cst_54 : f32 to vector<2x1xf32>
      %157 = arith.cmpf ogt, %155, %156 : vector<2x1xf32>
      %158 = arith.select %157, %149, %145 : vector<2x1xi1>, vector<2x1xf32>
      %159 = arith.select %157, %146, %149 : vector<2x1xi1>, vector<2x1xf32>
      %c9_i32 = arith.constant 9 : i32
      %160 = arith.addf %158, %159 : vector<2x1xf32>
      %cst_55 = arith.constant 5.000000e-01 : f32
      %161 = vector.broadcast %cst_55 : f32 to vector<2x1xf32>
      %162 = arith.mulf %161, %160 : vector<2x1xf32>
      %163 = vector.broadcast %162 : vector<2x1xf32> to vector<2x8xf32>
      %164 = arith.subf %36, %163 : vector<2x8xf32>
      %cst_56 = arith.constant 0.000000e+00 : f32
      %165 = vector.broadcast %cst_56 : f32 to vector<2x8xf32>
      %166 = arith.maximumf %164, %165 : vector<2x8xf32>
      %cst_57 = arith.constant dense<0.000000e+00> : vector<2xf32>
      %167 = vector.multi_reduction <add>, %166, %cst_57 [1] : vector<2x8xf32> to vector<2xf32>
      %168 = vector.shape_cast %167 : vector<2xf32> to vector<2x1xf32>
      %cst_58 = arith.constant 1.000000e+00 : f32
      %169 = vector.broadcast %cst_58 : f32 to vector<2x1xf32>
      %170 = arith.cmpf ogt, %168, %169 : vector<2x1xf32>
      %171 = arith.select %170, %162, %158 : vector<2x1xi1>, vector<2x1xf32>
      %172 = arith.select %170, %159, %162 : vector<2x1xi1>, vector<2x1xf32>
      %c10_i32 = arith.constant 10 : i32
      %173 = arith.addf %171, %172 : vector<2x1xf32>
      %cst_59 = arith.constant 5.000000e-01 : f32
      %174 = vector.broadcast %cst_59 : f32 to vector<2x1xf32>
      %175 = arith.mulf %174, %173 : vector<2x1xf32>
      %176 = vector.broadcast %175 : vector<2x1xf32> to vector<2x8xf32>
      %177 = arith.subf %36, %176 : vector<2x8xf32>
      %cst_60 = arith.constant 0.000000e+00 : f32
      %178 = vector.broadcast %cst_60 : f32 to vector<2x8xf32>
      %179 = arith.maximumf %177, %178 : vector<2x8xf32>
      %cst_61 = arith.constant dense<0.000000e+00> : vector<2xf32>
      %180 = vector.multi_reduction <add>, %179, %cst_61 [1] : vector<2x8xf32> to vector<2xf32>
      %181 = vector.shape_cast %180 : vector<2xf32> to vector<2x1xf32>
      %cst_62 = arith.constant 1.000000e+00 : f32
      %182 = vector.broadcast %cst_62 : f32 to vector<2x1xf32>
      %183 = arith.cmpf ogt, %181, %182 : vector<2x1xf32>
      %184 = arith.select %183, %175, %171 : vector<2x1xi1>, vector<2x1xf32>
      %185 = arith.select %183, %172, %175 : vector<2x1xi1>, vector<2x1xf32>
      %c11_i32 = arith.constant 11 : i32
      %186 = arith.addf %184, %185 : vector<2x1xf32>
      %cst_63 = arith.constant 5.000000e-01 : f32
      %187 = vector.broadcast %cst_63 : f32 to vector<2x1xf32>
      %188 = arith.mulf %187, %186 : vector<2x1xf32>
      %189 = vector.broadcast %188 : vector<2x1xf32> to vector<2x8xf32>
      %190 = arith.subf %36, %189 : vector<2x8xf32>
      %cst_64 = arith.constant 0.000000e+00 : f32
      %191 = vector.broadcast %cst_64 : f32 to vector<2x8xf32>
      %192 = arith.maximumf %190, %191 : vector<2x8xf32>
      %cst_65 = arith.constant dense<0.000000e+00> : vector<2xf32>
      %193 = vector.multi_reduction <add>, %192, %cst_65 [1] : vector<2x8xf32> to vector<2xf32>
      %194 = vector.shape_cast %193 : vector<2xf32> to vector<2x1xf32>
      %cst_66 = arith.constant 1.000000e+00 : f32
      %195 = vector.broadcast %cst_66 : f32 to vector<2x1xf32>
      %196 = arith.cmpf ogt, %194, %195 : vector<2x1xf32>
      %197 = arith.select %196, %188, %184 : vector<2x1xi1>, vector<2x1xf32>
      %198 = arith.select %196, %185, %188 : vector<2x1xi1>, vector<2x1xf32>
      %c12_i32 = arith.constant 12 : i32
      %199 = arith.addf %197, %198 : vector<2x1xf32>
      %cst_67 = arith.constant 5.000000e-01 : f32
      %200 = vector.broadcast %cst_67 : f32 to vector<2x1xf32>
      %201 = arith.mulf %200, %199 : vector<2x1xf32>
      %202 = vector.broadcast %201 : vector<2x1xf32> to vector<2x8xf32>
      %203 = arith.subf %36, %202 : vector<2x8xf32>
      %cst_68 = arith.constant 0.000000e+00 : f32
      %204 = vector.broadcast %cst_68 : f32 to vector<2x8xf32>
      %205 = arith.maximumf %203, %204 : vector<2x8xf32>
      %cst_69 = arith.constant dense<0.000000e+00> : vector<2xf32>
      %206 = vector.multi_reduction <add>, %205, %cst_69 [1] : vector<2x8xf32> to vector<2xf32>
      %207 = vector.shape_cast %206 : vector<2xf32> to vector<2x1xf32>
      %cst_70 = arith.constant 1.000000e+00 : f32
      %208 = vector.broadcast %cst_70 : f32 to vector<2x1xf32>
      %209 = arith.cmpf ogt, %207, %208 : vector<2x1xf32>
      %210 = arith.select %209, %201, %197 : vector<2x1xi1>, vector<2x1xf32>
      %211 = arith.select %209, %198, %201 : vector<2x1xi1>, vector<2x1xf32>
      %c13_i32 = arith.constant 13 : i32
      %212 = arith.addf %210, %211 : vector<2x1xf32>
      %cst_71 = arith.constant 5.000000e-01 : f32
      %213 = vector.broadcast %cst_71 : f32 to vector<2x1xf32>
      %214 = arith.mulf %213, %212 : vector<2x1xf32>
      %215 = vector.broadcast %214 : vector<2x1xf32> to vector<2x8xf32>
      %216 = arith.subf %36, %215 : vector<2x8xf32>
      %cst_72 = arith.constant 0.000000e+00 : f32
      %217 = vector.broadcast %cst_72 : f32 to vector<2x8xf32>
      %218 = arith.maximumf %216, %217 : vector<2x8xf32>
      %cst_73 = arith.constant dense<0.000000e+00> : vector<2xf32>
      %219 = vector.multi_reduction <add>, %218, %cst_73 [1] : vector<2x8xf32> to vector<2xf32>
      %220 = vector.shape_cast %219 : vector<2xf32> to vector<2x1xf32>
      %cst_74 = arith.constant 1.000000e+00 : f32
      %221 = vector.broadcast %cst_74 : f32 to vector<2x1xf32>
      %222 = arith.cmpf ogt, %220, %221 : vector<2x1xf32>
      %223 = arith.select %222, %214, %210 : vector<2x1xi1>, vector<2x1xf32>
      %224 = arith.select %222, %211, %214 : vector<2x1xi1>, vector<2x1xf32>
      %c14_i32 = arith.constant 14 : i32
      %225 = arith.addf %223, %224 : vector<2x1xf32>
      %cst_75 = arith.constant 5.000000e-01 : f32
      %226 = vector.broadcast %cst_75 : f32 to vector<2x1xf32>
      %227 = arith.mulf %226, %225 : vector<2x1xf32>
      %228 = vector.broadcast %227 : vector<2x1xf32> to vector<2x8xf32>
      %229 = arith.subf %36, %228 : vector<2x8xf32>
      %cst_76 = arith.constant 0.000000e+00 : f32
      %230 = vector.broadcast %cst_76 : f32 to vector<2x8xf32>
      %231 = arith.maximumf %229, %230 : vector<2x8xf32>
      %cst_77 = arith.constant dense<0.000000e+00> : vector<2xf32>
      %232 = vector.multi_reduction <add>, %231, %cst_77 [1] : vector<2x8xf32> to vector<2xf32>
      %233 = vector.shape_cast %232 : vector<2xf32> to vector<2x1xf32>
      %cst_78 = arith.constant 1.000000e+00 : f32
      %234 = vector.broadcast %cst_78 : f32 to vector<2x1xf32>
      %235 = arith.cmpf ogt, %233, %234 : vector<2x1xf32>
      %236 = arith.select %235, %227, %223 : vector<2x1xi1>, vector<2x1xf32>
      %237 = arith.select %235, %224, %227 : vector<2x1xi1>, vector<2x1xf32>
      %c15_i32 = arith.constant 15 : i32
      %238 = arith.addf %236, %237 : vector<2x1xf32>
      %cst_79 = arith.constant 5.000000e-01 : f32
      %239 = vector.broadcast %cst_79 : f32 to vector<2x1xf32>
      %240 = arith.mulf %239, %238 : vector<2x1xf32>
      %241 = vector.broadcast %240 : vector<2x1xf32> to vector<2x8xf32>
      %242 = arith.subf %36, %241 : vector<2x8xf32>
      %cst_80 = arith.constant 0.000000e+00 : f32
      %243 = vector.broadcast %cst_80 : f32 to vector<2x8xf32>
      %244 = arith.maximumf %242, %243 : vector<2x8xf32>
      %cst_81 = arith.constant dense<0.000000e+00> : vector<2xf32>
      %245 = vector.multi_reduction <add>, %244, %cst_81 [1] : vector<2x8xf32> to vector<2xf32>
      %246 = vector.shape_cast %245 : vector<2xf32> to vector<2x1xf32>
      %cst_82 = arith.constant 1.000000e+00 : f32
      %247 = vector.broadcast %cst_82 : f32 to vector<2x1xf32>
      %248 = arith.cmpf ogt, %246, %247 : vector<2x1xf32>
      %249 = arith.select %248, %240, %236 : vector<2x1xi1>, vector<2x1xf32>
      %250 = arith.select %248, %237, %240 : vector<2x1xi1>, vector<2x1xf32>
      %c16_i32 = arith.constant 16 : i32
      %251 = arith.addf %249, %250 : vector<2x1xf32>
      %cst_83 = arith.constant 5.000000e-01 : f32
      %252 = vector.broadcast %cst_83 : f32 to vector<2x1xf32>
      %253 = arith.mulf %252, %251 : vector<2x1xf32>
      %254 = vector.broadcast %253 : vector<2x1xf32> to vector<2x8xf32>
      %255 = arith.subf %36, %254 : vector<2x8xf32>
      %cst_84 = arith.constant 0.000000e+00 : f32
      %256 = vector.broadcast %cst_84 : f32 to vector<2x8xf32>
      %257 = arith.maximumf %255, %256 : vector<2x8xf32>
      %cst_85 = arith.constant dense<0.000000e+00> : vector<2xf32>
      %258 = vector.multi_reduction <add>, %257, %cst_85 [1] : vector<2x8xf32> to vector<2xf32>
      %259 = vector.shape_cast %258 : vector<2xf32> to vector<2x1xf32>
      %cst_86 = arith.constant 1.000000e+00 : f32
      %260 = vector.broadcast %cst_86 : f32 to vector<2x1xf32>
      %261 = arith.cmpf ogt, %259, %260 : vector<2x1xf32>
      %262 = arith.select %261, %253, %249 : vector<2x1xi1>, vector<2x1xf32>
      %263 = arith.select %261, %250, %253 : vector<2x1xi1>, vector<2x1xf32>
      %c17_i32 = arith.constant 17 : i32
      %264 = arith.addf %262, %263 : vector<2x1xf32>
      %cst_87 = arith.constant 5.000000e-01 : f32
      %265 = vector.broadcast %cst_87 : f32 to vector<2x1xf32>
      %266 = arith.mulf %265, %264 : vector<2x1xf32>
      %267 = vector.broadcast %266 : vector<2x1xf32> to vector<2x8xf32>
      %268 = arith.subf %36, %267 : vector<2x8xf32>
      %cst_88 = arith.constant 0.000000e+00 : f32
      %269 = vector.broadcast %cst_88 : f32 to vector<2x8xf32>
      %270 = arith.maximumf %268, %269 : vector<2x8xf32>
      %cst_89 = arith.constant dense<0.000000e+00> : vector<2xf32>
      %271 = vector.multi_reduction <add>, %270, %cst_89 [1] : vector<2x8xf32> to vector<2xf32>
      %272 = vector.shape_cast %271 : vector<2xf32> to vector<2x1xf32>
      %cst_90 = arith.constant 1.000000e+00 : f32
      %273 = vector.broadcast %cst_90 : f32 to vector<2x1xf32>
      %274 = arith.cmpf ogt, %272, %273 : vector<2x1xf32>
      %275 = arith.select %274, %266, %262 : vector<2x1xi1>, vector<2x1xf32>
      %276 = arith.select %274, %263, %266 : vector<2x1xi1>, vector<2x1xf32>
      %c18_i32 = arith.constant 18 : i32
      %277 = arith.addf %275, %276 : vector<2x1xf32>
      %cst_91 = arith.constant 5.000000e-01 : f32
      %278 = vector.broadcast %cst_91 : f32 to vector<2x1xf32>
      %279 = arith.mulf %278, %277 : vector<2x1xf32>
      %280 = vector.broadcast %279 : vector<2x1xf32> to vector<2x8xf32>
      %281 = arith.subf %36, %280 : vector<2x8xf32>
      %cst_92 = arith.constant 0.000000e+00 : f32
      %282 = vector.broadcast %cst_92 : f32 to vector<2x8xf32>
      %283 = arith.maximumf %281, %282 : vector<2x8xf32>
      %cst_93 = arith.constant dense<0.000000e+00> : vector<2xf32>
      %284 = vector.multi_reduction <add>, %283, %cst_93 [1] : vector<2x8xf32> to vector<2xf32>
      %285 = vector.shape_cast %284 : vector<2xf32> to vector<2x1xf32>
      %cst_94 = arith.constant 1.000000e+00 : f32
      %286 = vector.broadcast %cst_94 : f32 to vector<2x1xf32>
      %287 = arith.cmpf ogt, %285, %286 : vector<2x1xf32>
      %288 = arith.select %287, %279, %275 : vector<2x1xi1>, vector<2x1xf32>
      %289 = arith.select %287, %276, %279 : vector<2x1xi1>, vector<2x1xf32>
      %c19_i32 = arith.constant 19 : i32
      %290 = arith.addf %288, %289 : vector<2x1xf32>
      %cst_95 = arith.constant 5.000000e-01 : f32
      %291 = vector.broadcast %cst_95 : f32 to vector<2x1xf32>
      %292 = arith.mulf %291, %290 : vector<2x1xf32>
      %293 = vector.broadcast %292 : vector<2x1xf32> to vector<2x8xf32>
      %294 = arith.subf %36, %293 : vector<2x8xf32>
      %cst_96 = arith.constant 0.000000e+00 : f32
      %295 = vector.broadcast %cst_96 : f32 to vector<2x8xf32>
      %296 = arith.maximumf %294, %295 : vector<2x8xf32>
      %cst_97 = arith.constant dense<0.000000e+00> : vector<2xf32>
      %297 = vector.multi_reduction <add>, %296, %cst_97 [1] : vector<2x8xf32> to vector<2xf32>
      %298 = vector.shape_cast %297 : vector<2xf32> to vector<2x1xf32>
      %cst_98 = arith.constant 1.000000e+00 : f32
      %299 = vector.broadcast %cst_98 : f32 to vector<2x1xf32>
      %300 = arith.cmpf ogt, %298, %299 : vector<2x1xf32>
      %301 = arith.select %300, %292, %288 : vector<2x1xi1>, vector<2x1xf32>
      %302 = arith.select %300, %289, %292 : vector<2x1xi1>, vector<2x1xf32>
      %c20_i32 = arith.constant 20 : i32
      %303 = arith.addf %301, %302 : vector<2x1xf32>
      %cst_99 = arith.constant 5.000000e-01 : f32
      %304 = vector.broadcast %cst_99 : f32 to vector<2x1xf32>
      %305 = arith.mulf %304, %303 : vector<2x1xf32>
      %306 = vector.broadcast %305 : vector<2x1xf32> to vector<2x8xf32>
      %307 = arith.subf %36, %306 : vector<2x8xf32>
      %cst_100 = arith.constant 0.000000e+00 : f32
      %308 = vector.broadcast %cst_100 : f32 to vector<2x8xf32>
      %309 = arith.maximumf %307, %308 : vector<2x8xf32>
      %cst_101 = arith.constant dense<0.000000e+00> : vector<2xf32>
      %310 = vector.multi_reduction <add>, %309, %cst_101 [1] : vector<2x8xf32> to vector<2xf32>
      %311 = vector.shape_cast %310 : vector<2xf32> to vector<2x1xf32>
      %cst_102 = arith.constant 1.000000e+00 : f32
      %312 = vector.broadcast %cst_102 : f32 to vector<2x1xf32>
      %313 = arith.cmpf ogt, %311, %312 : vector<2x1xf32>
      %314 = arith.select %313, %305, %301 : vector<2x1xi1>, vector<2x1xf32>
      %315 = arith.select %313, %302, %305 : vector<2x1xi1>, vector<2x1xf32>
      %c21_i32 = arith.constant 21 : i32
      %316 = arith.addf %314, %315 : vector<2x1xf32>
      %cst_103 = arith.constant 5.000000e-01 : f32
      %317 = vector.broadcast %cst_103 : f32 to vector<2x1xf32>
      %318 = arith.mulf %317, %316 : vector<2x1xf32>
      %319 = vector.broadcast %318 : vector<2x1xf32> to vector<2x8xf32>
      %320 = arith.subf %36, %319 : vector<2x8xf32>
      %cst_104 = arith.constant 0.000000e+00 : f32
      %321 = vector.broadcast %cst_104 : f32 to vector<2x8xf32>
      %322 = arith.maximumf %320, %321 : vector<2x8xf32>
      %cst_105 = arith.constant dense<0.000000e+00> : vector<2xf32>
      %323 = vector.multi_reduction <add>, %322, %cst_105 [1] : vector<2x8xf32> to vector<2xf32>
      %324 = vector.shape_cast %323 : vector<2xf32> to vector<2x1xf32>
      %cst_106 = arith.constant 1.000000e+00 : f32
      %325 = vector.broadcast %cst_106 : f32 to vector<2x1xf32>
      %326 = arith.cmpf ogt, %324, %325 : vector<2x1xf32>
      %327 = arith.select %326, %318, %314 : vector<2x1xi1>, vector<2x1xf32>
      %328 = arith.select %326, %315, %318 : vector<2x1xi1>, vector<2x1xf32>
      %c22_i32 = arith.constant 22 : i32
      %329 = arith.addf %327, %328 : vector<2x1xf32>
      %cst_107 = arith.constant 5.000000e-01 : f32
      %330 = vector.broadcast %cst_107 : f32 to vector<2x1xf32>
      %331 = arith.mulf %330, %329 : vector<2x1xf32>
      %332 = vector.broadcast %331 : vector<2x1xf32> to vector<2x8xf32>
      %333 = arith.subf %36, %332 : vector<2x8xf32>
      %cst_108 = arith.constant 0.000000e+00 : f32
      %334 = vector.broadcast %cst_108 : f32 to vector<2x8xf32>
      %335 = arith.maximumf %333, %334 : vector<2x8xf32>
      %cst_109 = arith.constant dense<0.000000e+00> : vector<2xf32>
      %336 = vector.multi_reduction <add>, %335, %cst_109 [1] : vector<2x8xf32> to vector<2xf32>
      %337 = vector.shape_cast %336 : vector<2xf32> to vector<2x1xf32>
      %cst_110 = arith.constant 1.000000e+00 : f32
      %338 = vector.broadcast %cst_110 : f32 to vector<2x1xf32>
      %339 = arith.cmpf ogt, %337, %338 : vector<2x1xf32>
      %340 = arith.select %339, %331, %327 : vector<2x1xi1>, vector<2x1xf32>
      %341 = arith.select %339, %328, %331 : vector<2x1xi1>, vector<2x1xf32>
      %c23_i32 = arith.constant 23 : i32
      %342 = arith.addf %340, %341 : vector<2x1xf32>
      %cst_111 = arith.constant 5.000000e-01 : f32
      %343 = vector.broadcast %cst_111 : f32 to vector<2x1xf32>
      %344 = arith.mulf %343, %342 : vector<2x1xf32>
      %345 = vector.broadcast %344 : vector<2x1xf32> to vector<2x8xf32>
      %346 = arith.subf %36, %345 : vector<2x8xf32>
      %cst_112 = arith.constant 0.000000e+00 : f32
      %347 = vector.broadcast %cst_112 : f32 to vector<2x8xf32>
      %348 = arith.maximumf %346, %347 : vector<2x8xf32>
      %cst_113 = arith.constant dense<0.000000e+00> : vector<2xf32>
      %349 = vector.multi_reduction <add>, %348, %cst_113 [1] : vector<2x8xf32> to vector<2xf32>
      %350 = vector.shape_cast %349 : vector<2xf32> to vector<2x1xf32>
      %cst_114 = arith.constant 1.000000e+00 : f32
      %351 = vector.broadcast %cst_114 : f32 to vector<2x1xf32>
      %352 = arith.cmpf ogt, %350, %351 : vector<2x1xf32>
      %353 = arith.select %352, %344, %340 : vector<2x1xi1>, vector<2x1xf32>
      %354 = arith.select %352, %341, %344 : vector<2x1xi1>, vector<2x1xf32>
      %c24_i32 = arith.constant 24 : i32
      %355 = arith.addf %353, %354 : vector<2x1xf32>
      %cst_115 = arith.constant 5.000000e-01 : f32
      %356 = vector.broadcast %cst_115 : f32 to vector<2x1xf32>
      %357 = arith.mulf %356, %355 : vector<2x1xf32>
      %358 = vector.broadcast %357 : vector<2x1xf32> to vector<2x8xf32>
      %359 = arith.subf %36, %358 : vector<2x8xf32>
      %cst_116 = arith.constant 0.000000e+00 : f32
      %360 = vector.broadcast %cst_116 : f32 to vector<2x8xf32>
      %361 = arith.maximumf %359, %360 : vector<2x8xf32>
      %cst_117 = arith.constant dense<0.000000e+00> : vector<2xf32>
      %362 = vector.multi_reduction <add>, %361, %cst_117 [1] : vector<2x8xf32> to vector<2xf32>
      %363 = vector.shape_cast %362 : vector<2xf32> to vector<2x1xf32>
      %cst_118 = arith.constant 1.000000e+00 : f32
      %364 = vector.broadcast %cst_118 : f32 to vector<2x1xf32>
      %365 = arith.cmpf ogt, %363, %364 : vector<2x1xf32>
      %366 = arith.select %365, %357, %353 : vector<2x1xi1>, vector<2x1xf32>
      %367 = arith.select %365, %354, %357 : vector<2x1xi1>, vector<2x1xf32>
      %c25_i32 = arith.constant 25 : i32
      %368 = arith.addf %366, %367 : vector<2x1xf32>
      %cst_119 = arith.constant 5.000000e-01 : f32
      %369 = vector.broadcast %cst_119 : f32 to vector<2x1xf32>
      %370 = arith.mulf %369, %368 : vector<2x1xf32>
      %371 = vector.broadcast %370 : vector<2x1xf32> to vector<2x8xf32>
      %372 = arith.subf %36, %371 : vector<2x8xf32>
      %cst_120 = arith.constant 0.000000e+00 : f32
      %373 = vector.broadcast %cst_120 : f32 to vector<2x8xf32>
      %374 = arith.maximumf %372, %373 : vector<2x8xf32>
      %cst_121 = arith.constant dense<0.000000e+00> : vector<2xf32>
      %375 = vector.multi_reduction <add>, %374, %cst_121 [1] : vector<2x8xf32> to vector<2xf32>
      %376 = vector.shape_cast %375 : vector<2xf32> to vector<2x1xf32>
      %cst_122 = arith.constant 1.000000e+00 : f32
      %377 = vector.broadcast %cst_122 : f32 to vector<2x1xf32>
      %378 = arith.cmpf ogt, %376, %377 : vector<2x1xf32>
      %379 = arith.select %378, %370, %366 : vector<2x1xi1>, vector<2x1xf32>
      %380 = arith.select %378, %367, %370 : vector<2x1xi1>, vector<2x1xf32>
      %c26_i32 = arith.constant 26 : i32
      %381 = arith.addf %379, %380 : vector<2x1xf32>
      %cst_123 = arith.constant 5.000000e-01 : f32
      %382 = vector.broadcast %cst_123 : f32 to vector<2x1xf32>
      %383 = arith.mulf %382, %381 : vector<2x1xf32>
      %384 = vector.broadcast %383 : vector<2x1xf32> to vector<2x8xf32>
      %385 = arith.subf %36, %384 : vector<2x8xf32>
      %cst_124 = arith.constant 0.000000e+00 : f32
      %386 = vector.broadcast %cst_124 : f32 to vector<2x8xf32>
      %387 = arith.maximumf %385, %386 : vector<2x8xf32>
      %cst_125 = arith.constant dense<0.000000e+00> : vector<2xf32>
      %388 = vector.multi_reduction <add>, %387, %cst_125 [1] : vector<2x8xf32> to vector<2xf32>
      %389 = vector.shape_cast %388 : vector<2xf32> to vector<2x1xf32>
      %cst_126 = arith.constant 1.000000e+00 : f32
      %390 = vector.broadcast %cst_126 : f32 to vector<2x1xf32>
      %391 = arith.cmpf ogt, %389, %390 : vector<2x1xf32>
      %392 = arith.select %391, %383, %379 : vector<2x1xi1>, vector<2x1xf32>
      %393 = arith.select %391, %380, %383 : vector<2x1xi1>, vector<2x1xf32>
      %c27_i32 = arith.constant 27 : i32
      %394 = arith.addf %392, %393 : vector<2x1xf32>
      %cst_127 = arith.constant 5.000000e-01 : f32
      %395 = vector.broadcast %cst_127 : f32 to vector<2x1xf32>
      %396 = arith.mulf %395, %394 : vector<2x1xf32>
      %397 = vector.broadcast %396 : vector<2x1xf32> to vector<2x8xf32>
      %398 = arith.subf %36, %397 : vector<2x8xf32>
      %cst_128 = arith.constant 0.000000e+00 : f32
      %399 = vector.broadcast %cst_128 : f32 to vector<2x8xf32>
      %400 = arith.maximumf %398, %399 : vector<2x8xf32>
      %cst_129 = arith.constant dense<0.000000e+00> : vector<2xf32>
      %401 = vector.multi_reduction <add>, %400, %cst_129 [1] : vector<2x8xf32> to vector<2xf32>
      %402 = vector.shape_cast %401 : vector<2xf32> to vector<2x1xf32>
      %cst_130 = arith.constant 1.000000e+00 : f32
      %403 = vector.broadcast %cst_130 : f32 to vector<2x1xf32>
      %404 = arith.cmpf ogt, %402, %403 : vector<2x1xf32>
      %405 = arith.select %404, %396, %392 : vector<2x1xi1>, vector<2x1xf32>
      %406 = arith.select %404, %393, %396 : vector<2x1xi1>, vector<2x1xf32>
      %c28_i32 = arith.constant 28 : i32
      %407 = arith.addf %405, %406 : vector<2x1xf32>
      %cst_131 = arith.constant 5.000000e-01 : f32
      %408 = vector.broadcast %cst_131 : f32 to vector<2x1xf32>
      %409 = arith.mulf %408, %407 : vector<2x1xf32>
      %410 = vector.broadcast %409 : vector<2x1xf32> to vector<2x8xf32>
      %411 = arith.subf %36, %410 : vector<2x8xf32>
      %cst_132 = arith.constant 0.000000e+00 : f32
      %412 = vector.broadcast %cst_132 : f32 to vector<2x8xf32>
      %413 = arith.maximumf %411, %412 : vector<2x8xf32>
      %cst_133 = arith.constant dense<0.000000e+00> : vector<2xf32>
      %414 = vector.multi_reduction <add>, %413, %cst_133 [1] : vector<2x8xf32> to vector<2xf32>
      %415 = vector.shape_cast %414 : vector<2xf32> to vector<2x1xf32>
      %cst_134 = arith.constant 1.000000e+00 : f32
      %416 = vector.broadcast %cst_134 : f32 to vector<2x1xf32>
      %417 = arith.cmpf ogt, %415, %416 : vector<2x1xf32>
      %418 = arith.select %417, %409, %405 : vector<2x1xi1>, vector<2x1xf32>
      %419 = arith.select %417, %406, %409 : vector<2x1xi1>, vector<2x1xf32>
      %c29_i32 = arith.constant 29 : i32
      %420 = arith.addf %418, %419 : vector<2x1xf32>
      %cst_135 = arith.constant 5.000000e-01 : f32
      %421 = vector.broadcast %cst_135 : f32 to vector<2x1xf32>
      %422 = arith.mulf %421, %420 : vector<2x1xf32>
      %423 = vector.broadcast %422 : vector<2x1xf32> to vector<2x8xf32>
      %424 = arith.subf %36, %423 : vector<2x8xf32>
      %cst_136 = arith.constant 0.000000e+00 : f32
      %425 = vector.broadcast %cst_136 : f32 to vector<2x8xf32>
      %426 = arith.maximumf %424, %425 : vector<2x8xf32>
      %cst_137 = arith.constant dense<0.000000e+00> : vector<2xf32>
      %427 = vector.multi_reduction <add>, %426, %cst_137 [1] : vector<2x8xf32> to vector<2xf32>
      %428 = vector.shape_cast %427 : vector<2xf32> to vector<2x1xf32>
      %cst_138 = arith.constant 1.000000e+00 : f32
      %429 = vector.broadcast %cst_138 : f32 to vector<2x1xf32>
      %430 = arith.cmpf ogt, %428, %429 : vector<2x1xf32>
      %431 = arith.select %430, %422, %418 : vector<2x1xi1>, vector<2x1xf32>
      %432 = arith.select %430, %419, %422 : vector<2x1xi1>, vector<2x1xf32>
      %433 = arith.addf %431, %432 : vector<2x1xf32>
      %cst_139 = arith.constant 5.000000e-01 : f32
      %434 = vector.broadcast %cst_139 : f32 to vector<2x1xf32>
      %435 = arith.mulf %434, %433 : vector<2x1xf32>
      %436 = vector.broadcast %435 : vector<2x1xf32> to vector<2x8xf32>
      %437 = arith.subf %36, %436 : vector<2x8xf32>
      %cst_140 = arith.constant 0.000000e+00 : f32
      %438 = vector.broadcast %cst_140 : f32 to vector<2x8xf32>
      %439 = arith.maximumf %437, %438 : vector<2x8xf32>
      %cst_141 = arith.constant 4.000000e+00 : f32
      %440 = vector.broadcast %cst_141 : f32 to vector<1x1xf32>
      %441 = arith.mulf %440, %arg7 : vector<1x1xf32>
      %442 = arith.mulf %441, %arg7 : vector<1x1xf32>
      %cst_142 = arith.constant 1.000000e+00 : f32
      %443 = vector.broadcast %cst_142 : f32 to vector<1x1xf32>
      %444 = arith.addf %443, %442 : vector<1x1xf32>
      %445 = math.sqrt %444 : vector<1x1xf32>
      %cst_143 = arith.constant 1.000000e+00 : f32
      %446 = vector.broadcast %cst_143 : f32 to vector<1x1xf32>
      %447 = arith.addf %446, %445 : vector<1x1xf32>
      %cst_144 = arith.constant 5.000000e-01 : f32
      %448 = vector.broadcast %cst_144 : f32 to vector<1x1xf32>
      %449 = arith.mulf %448, %447 : vector<1x1xf32>
      %cst_145 = arith.constant 1.000000e+00 : f32
      %450 = vector.broadcast %cst_145 : f32 to vector<1x1xf32>
      %451 = arith.subf %arg7, %450 : vector<1x1xf32>
      %452 = arith.divf %451, %449 : vector<1x1xf32>
      %453 = arith.subf %439, %arg5 : vector<2x8xf32>
      %454 = vector.broadcast %452 : vector<1x1xf32> to vector<2x8xf32>
      %455 = arith.mulf %454, %453 : vector<2x8xf32>
      %456 = arith.addf %439, %455 : vector<2x8xf32>
      scf.yield %439, %456, %449 : vector<2x8xf32>, vector<2x8xf32>, vector<1x1xf32>
    }
    %c0_11 = arith.constant 0 : index
    %c0_12 = arith.constant 0 : index
    %31 = vector.load %arg3[%c0_11, %c0_12] : memref<2x8xf32, #tpu.memory_space<vmem>>, vector<2x8xf32>
    tpu.vector_store %arg3[%c0_11, %c0_12], %30#0 {strides = array<i32>} : memref<2x8xf32, #tpu.memory_space<vmem>>, vector<2x8xf32>,
    return
  }
  func.func @transform_0(%arg0: i32) -> (i32, i32) {
    %c0_i32 = arith.constant 0 : i32
    %c0_i32_0 = arith.constant 0 : i32
    return %arg0, %c0_i32 : i32, i32
  }
  func.func @transform_1(%arg0: i32) -> (i32, i32, i32) {
    %c0_i32 = arith.constant 0 : i32
    %c0_i32_0 = arith.constant 0 : i32
    %c0_i32_1 = arith.constant 0 : i32
    return %arg0, %c0_i32, %c0_i32_0 : i32, i32, i32
  }
  func.func @transform_2(%arg0: i32) -> (i32, i32) {
    %c0_i32 = arith.constant 0 : i32
    %c0_i32_0 = arith.constant 0 : i32
    return %arg0, %c0_i32 : i32, i32
  }
}

</mosaic_0001>

<llo_original>
// kernel: tpu_custom_call.1
$region0: #{tpu_custom_call.1}
  #allocation0 [shape = 'u32[]', space=smem, size = 0x4, offset = 0x4, fixed_abs, tag = 'smem constant byte address 0x4 - core index']
  #allocation1 [shape = 'u32[144,128]{1,0:T(1,128)}', space=vmem, size = 0x12000, scoped, tag = 'internal scratch']
  %s0 = inlined_call_operand.hbm [shape: f32[2,8], index: 0, kind: input, shape index: {}]
  %s1 = inlined_call_operand.hbm [shape: f32[2,8,8], index: 1, kind: input, shape index: {}]
  %s2 = inlined_call_operand.hbm [shape: f32[2,8], index: 2, kind: output, shape index: {}]
  %s3 = sld [smem:[#allocation0]]
  $region33: #{tpu_custom_call.1} parent=0
    _
  %s5 = ssub.s32 1, %s3
  %s6 = scalar_select 0, %s5, %s3
  $region1: #{tpu_custom_call.1} parent=0
    #allocation2 [shape = 'u8[1024]{0}', space=vmem, size = 0x400, scoped, tag = 'input window, operand 0, single buffered']
    #allocation3 [shape = 's32[1]{0}', space=sflag, size = 0x4, scoped, tag = 'scoped memory for tpu_custom_call.1']
    #allocation4 [shape = 's32[1]{0}', space=sflag, size = 0x4, scoped, tag = 'scoped memory for tpu_custom_call.1']
    #allocation5 [shape = 'u8[8192]{0}', space=vmem, size = 0x2000, scoped, tag = 'input window, operand 1, single buffered']
    #allocation6 [shape = 's32[1]{0}', space=sflag, size = 0x4, scoped, tag = 'scoped memory for tpu_custom_call.1']
    #allocation7 [shape = 'u8[1024]{0}', space=vmem, size = 0x400, scoped, tag = 'output window, operand 0, single buffered']
    %7 = vsyncpa [#allocation3], 0
    %8 = vsyncpa [#allocation6], 0
    %9 = vsyncpa [#allocation4], 0
    // Predicated region
    $region2: #{tpu_custom_call.1} parent=1 // pred_check
      _
    $region3: #{tpu_custom_call.1} parent=1 // pred_check_branch
      %11 = sbr.rel (0) target = $region5
    $region4: #{tpu_custom_call.1} parent=1 // pred_region
      %s13 = ssub.s32 32, 32
      %14 = vsyncadd [#allocation3], %s13
      %s16 = sshll.u32 [#allocation2], 4
      %s17 = int_to_ptr.vmem [resolvable:$true] %s16
      %19 = dma.hbm_to_vmem [thread:$0]  %s0, 32, %s17, [#allocation3]
    $region5: #{tpu_custom_call.1} parent=1 // pred_fallthru
      _
    // Predicated region
    $region6: #{tpu_custom_call.1} parent=1 // pred_check
      _
    $region7: #{tpu_custom_call.1} parent=1 // pred_check_branch
      %21 = sbr.rel (0) target = $region9
    $region8: #{tpu_custom_call.1} parent=1 // pred_region
      %s23 = ssub.s32 256, 256
      %24 = vsyncadd [#allocation6], %s23
      %s25 = sshll.u32 [#allocation5], 4
      %s26 = int_to_ptr.vmem [resolvable:$true] %s25
      %31 = dma.hbm_to_vmem [thread:$0]  %s1, 256, %s26, [#allocation6], 128, 128, 8
    $region9: #{tpu_custom_call.1} parent=1 // pred_fallthru
      _
    // Predicated region
    $region10: #{tpu_custom_call.1} parent=1 // pred_check
      _
    $region11: #{tpu_custom_call.1} parent=1 // pred_check_branch
      %33 = sbr.rel (0) target = $region13
    $region12: #{tpu_custom_call.1} parent=1 // pred_region
      %34 = dma.done [#allocation3], 32
    $region13: #{tpu_custom_call.1} parent=1 // pred_fallthru
      _
    // Predicated region
    $region14: #{tpu_custom_call.1} parent=1 // pred_check
      _
    $region15: #{tpu_custom_call.1} parent=1 // pred_check_branch
      %36 = sbr.rel (0) target = $region17
    $region16: #{tpu_custom_call.1} parent=1 // pred_region
      %37 = dma.done [#allocation6], 256
    $region17: #{tpu_custom_call.1} parent=1 // pred_fallthru
      _
    %v38 = vld [vmem:[#allocation2] sm:$0x3]
    %v39 = vld [vmem:[#allocation5] sm:$0xff]
    %v40 = vld [vmem:[#allocation5 + $0x8] sm:$0xff]
    %v41 = vand.u32 2147483647, %v39
    %v42 = vand.u32 2147483647, %v40
    %vm43 = vcmask 64512
    %v44 = vsel %vm43, %v41, 0.0
    %45 = vadd.xlane.f32.xlu0 %v44
    %v46 = vpop.xlane.xlu0 %45
    %v47 = vsel %vm43, %v42, 0.0
    %48 = vadd.xlane.f32.xlu0 %v47
    %v49 = vpop.xlane.xlu0 %48
    %v52 = vlaneseq
    %v53 = vand.u32 %v52, 127
    %v54 = vlaneseq
    %v55 = vshrl.u32 %v54, 7
    %v56 = vsub.s32 %v53, %v55
    %v57 = vrot.slane %v46, %v56
    %v58 = vlaneseq
    %v59 = vshrl.u32 %v58, 7
    %v60 = vsub.s32 %v53, %v59
    %v61 = vrot.slane %v49, %v60
    %vm62 = vcmask 1041409
    %v63 = vsel %vm62, %v61, %v57
    %vm65 = vcmask 58368
    %v66 = vsel %vm65, %v63, -inf
    %67 = vmax.xlane.f32.xlu0 %v66
    %v68 = vpop.xlane.xlu0 %67
    %v69 = vmul.f32 %v68, 2.0
    %v70 = vadd.f32 %v69, 1e-06
    %v71 = vrcp.pop %v70
    %v72 = vmul.f32 1.0, %v71
    %v73 = vlaneseq
    %v74 = vshrl.u32 %v73, 7
    %vm75 = vcmp.eq.s32.totalorder %v74, %v53
    %v76 = vsel %vm75, 1, 0
    %v77 = vcvt.s32.f32 %v76
    %v78 = vmul.f32 %v72, 2.0
    %v80 = vlaneseq
    %v81 = vshrl.u32 %v80, 7
    %v82 = vsub.s32 0, %v81
    %v83 = vrot.slane %v78, %v82
    %v84 = vlaneseq
    %v85 = vshrl.u32 %v84, 7
    %v86 = vsub.s32 1, %v85
    %v87 = vrot.slane %v78, %v86
    %v90 = vmul.f32 %v83, %v39
    %v91 = vmul.f32 %v87, %v40
    %v92 = vsub.f32 %v77, %v90
    %v93 = vsub.f32 %v77, %v91
    %v94 = vmul.f32 %v72, %v38
    loop: start=0, step=1, limit=500
    $region18: #{tpu_custom_call.1} parent=1 // loop_pre_header
      _
    $region19: #{tpu_custom_call.1} parent=1 // loop_header
      %s96 = sphi 0, %s100
      %p97 = scmp.ge.s32.totalorder %s96, 500
      %v101 = vphi 0.125, %v1697
      %v102 = vphi 0.125, %v1698
      %v103 = vphi 0.125, %v1718
      %v104 = vphi 0.125, %v1719
      %v105 = vphi 1.0, %v1710
    $region20: #{tpu_custom_call.1} parent=1 // loop_header_branch
      %99 = sbr.rel (%p97) target = $region24
    $region21: #{tpu_custom_call.1} parent=1 // loop_body
      %v108 = vlaneseq
      %v109 = vshrl.u32 %v108, 7
      %v110 = vsub.s32 0, %v109
      %v111 = vrot.slane %v92, %v110
      %113 = vbcast.lane.b32.xlu0 %v111, 256
      %v114 = vpop.permute.xlu0 %113
      %v115 = vlaneseq
      %v116 = vshrl.u32 %v115, 7
      %v117 = vsub.s32 1, %v116
      %v118 = vrot.slane %v92, %v117
      %120 = vbcast.lane.b32.xlu0 %v118, 256
      %v121 = vpop.permute.xlu0 %120
      %v122 = vlaneseq
      %v123 = vshrl.u32 %v122, 7
      %v124 = vsub.s32 2, %v123
      %v125 = vrot.slane %v92, %v124
      %127 = vbcast.lane.b32.xlu0 %v125, 256
      %v128 = vpop.permute.xlu0 %127
      %v129 = vlaneseq
      %v130 = vshrl.u32 %v129, 7
      %v131 = vsub.s32 3, %v130
      %v132 = vrot.slane %v92, %v131
      %134 = vbcast.lane.b32.xlu0 %v132, 256
      %v135 = vpop.permute.xlu0 %134
      %v136 = vlaneseq
      %v137 = vshrl.u32 %v136, 7
      %v138 = vsub.s32 4, %v137
      %v139 = vrot.slane %v92, %v138
      %141 = vbcast.lane.b32.xlu0 %v139, 256
      %v142 = vpop.permute.xlu0 %141
      %v143 = vlaneseq
      %v144 = vshrl.u32 %v143, 7
      %v145 = vsub.s32 5, %v144
      %v146 = vrot.slane %v92, %v145
      %148 = vbcast.lane.b32.xlu0 %v146, 256
      %v149 = vpop.permute.xlu0 %148
      %v150 = vlaneseq
      %v151 = vshrl.u32 %v150, 7
      %v152 = vsub.s32 6, %v151
      %v153 = vrot.slane %v92, %v152
      %155 = vbcast.lane.b32.xlu0 %v153, 256
      %v156 = vpop.permute.xlu0 %155
      %v157 = vlaneseq
      %v158 = vshrl.u32 %v157, 7
      %v159 = vsub.s32 7, %v158
      %v160 = vrot.slane %v92, %v159
      %162 = vbcast.lane.b32.xlu0 %v160, 256
      %v163 = vpop.permute.xlu0 %162
      %v164 = vlaneseq
      %v165 = vshrl.u32 %v164, 7
      %v166 = vsub.s32 0, %v165
      %v167 = vrot.slane %v93, %v166
      %169 = vbcast.lane.b32.xlu0 %v167, 256
      %v170 = vpop.permute.xlu0 %169
      %v171 = vlaneseq
      %v172 = vshrl.u32 %v171, 7
      %v173 = vsub.s32 1, %v172
      %v174 = vrot.slane %v93, %v173
      %176 = vbcast.lane.b32.xlu0 %v174, 256
      %v177 = vpop.permute.xlu0 %176
      %v178 = vlaneseq
      %v179 = vshrl.u32 %v178, 7
      %v180 = vsub.s32 2, %v179
      %v181 = vrot.slane %v93, %v180
      %183 = vbcast.lane.b32.xlu0 %v181, 256
      %v184 = vpop.permute.xlu0 %183
      %v185 = vlaneseq
      %v186 = vshrl.u32 %v185, 7
      %v187 = vsub.s32 3, %v186
      %v188 = vrot.slane %v93, %v187
      %190 = vbcast.lane.b32.xlu0 %v188, 256
      %v191 = vpop.permute.xlu0 %190
      %v192 = vlaneseq
      %v193 = vshrl.u32 %v192, 7
      %v194 = vsub.s32 4, %v193
      %v195 = vrot.slane %v93, %v194
      %197 = vbcast.lane.b32.xlu0 %v195, 256
      %v198 = vpop.permute.xlu0 %197
      %v199 = vlaneseq
      %v200 = vshrl.u32 %v199, 7
      %v201 = vsub.s32 5, %v200
      %v202 = vrot.slane %v93, %v201
      %204 = vbcast.lane.b32.xlu0 %v202, 256
      %v205 = vpop.permute.xlu0 %204
      %v206 = vlaneseq
      %v207 = vshrl.u32 %v206, 7
      %v208 = vsub.s32 6, %v207
      %v209 = vrot.slane %v93, %v208
      %211 = vbcast.lane.b32.xlu0 %v209, 256
      %v212 = vpop.permute.xlu0 %211
      %v213 = vlaneseq
      %v214 = vshrl.u32 %v213, 7
      %v215 = vsub.s32 7, %v214
      %v216 = vrot.slane %v93, %v215
      %218 = vbcast.lane.b32.xlu0 %v216, 256
      %v219 = vpop.permute.xlu0 %218
      %v236 = vmul.f32 %v103, %v114
      %v237 = vmul.f32 %v103, %v121
      %v238 = vmul.f32 %v103, %v128
      %v239 = vmul.f32 %v103, %v135
      %v240 = vmul.f32 %v103, %v142
      %v241 = vmul.f32 %v103, %v149
      %v242 = vmul.f32 %v103, %v156
      %v243 = vmul.f32 %v103, %v163
      %v244 = vmul.f32 %v104, %v170
      %v245 = vmul.f32 %v104, %v177
      %v246 = vmul.f32 %v104, %v184
      %v247 = vmul.f32 %v104, %v191
      %v248 = vmul.f32 %v104, %v198
      %v249 = vmul.f32 %v104, %v205
      %v250 = vmul.f32 %v104, %v212
      %v251 = vmul.f32 %v104, %v219
      %268 = vset.pattern.permute.xlu0 0
      %269 = vperm.xlu0 %268, %v236
      %v270 = vpop.permute.xlu0 %269
      %271 = vset.pattern.permute.xlu0 0
      %272 = vperm.xlu0 %271, %v237
      %v273 = vpop.permute.xlu0 %272
      %274 = vset.pattern.permute.xlu0 0
      %275 = vperm.xlu0 %274, %v238
      %v276 = vpop.permute.xlu0 %275
      %277 = vset.pattern.permute.xlu0 0
      %278 = vperm.xlu0 %277, %v239
      %v279 = vpop.permute.xlu0 %278
      %280 = vset.pattern.permute.xlu0 0
      %281 = vperm.xlu0 %280, %v240
      %v282 = vpop.permute.xlu0 %281
      %283 = vset.pattern.permute.xlu0 0
      %284 = vperm.xlu0 %283, %v241
      %v285 = vpop.permute.xlu0 %284
      %286 = vset.pattern.permute.xlu0 0
      %287 = vperm.xlu0 %286, %v242
      %v288 = vpop.permute.xlu0 %287
      %289 = vset.pattern.permute.xlu0 0
      %290 = vperm.xlu0 %289, %v243
      %v291 = vpop.permute.xlu0 %290
      %292 = vset.pattern.permute.xlu0 0
      %293 = vperm.xlu0 %292, %v244
      %v294 = vpop.permute.xlu0 %293
      %295 = vset.pattern.permute.xlu0 0
      %296 = vperm.xlu0 %295, %v245
      %v297 = vpop.permute.xlu0 %296
      %298 = vset.pattern.permute.xlu0 0
      %299 = vperm.xlu0 %298, %v246
      %v300 = vpop.permute.xlu0 %299
      %301 = vset.pattern.permute.xlu0 0
      %302 = vperm.xlu0 %301, %v247
      %v303 = vpop.permute.xlu0 %302
      %304 = vset.pattern.permute.xlu0 0
      %305 = vperm.xlu0 %304, %v248
      %v306 = vpop.permute.xlu0 %305
      %307 = vset.pattern.permute.xlu0 0
      %308 = vperm.xlu0 %307, %v249
      %v309 = vpop.permute.xlu0 %308
      %310 = vset.pattern.permute.xlu0 0
      %311 = vperm.xlu0 %310, %v250
      %v312 = vpop.permute.xlu0 %311
      %313 = vset.pattern.permute.xlu0 0
      %314 = vperm.xlu0 %313, %v251
      %v315 = vpop.permute.xlu0 %314
      %v316 = vlaneseq
      %v317 = vshrl.u32 %v316, 7
      %v318 = vsub.s32 %v53, %v317
      %v319 = vrot.slane %v270, %v318
      %v320 = vlaneseq
      %v321 = vshrl.u32 %v320, 7
      %v322 = vsub.s32 %v53, %v321
      %v323 = vrot.slane %v273, %v322
      %v324 = vlaneseq
      %v325 = vshrl.u32 %v324, 7
      %v326 = vsub.s32 %v53, %v325
      %v327 = vrot.slane %v276, %v326
      %v328 = vlaneseq
      %v329 = vshrl.u32 %v328, 7
      %v330 = vsub.s32 %v53, %v329
      %v331 = vrot.slane %v279, %v330
      %v332 = vlaneseq
      %v333 = vshrl.u32 %v332, 7
      %v334 = vsub.s32 %v53, %v333
      %v335 = vrot.slane %v282, %v334
      %v336 = vlaneseq
      %v337 = vshrl.u32 %v336, 7
      %v338 = vsub.s32 %v53, %v337
      %v339 = vrot.slane %v285, %v338
      %v340 = vlaneseq
      %v341 = vshrl.u32 %v340, 7
      %v342 = vsub.s32 %v53, %v341
      %v343 = vrot.slane %v288, %v342
      %v344 = vlaneseq
      %v345 = vshrl.u32 %v344, 7
      %v346 = vsub.s32 %v53, %v345
      %v347 = vrot.slane %v291, %v346
      %v348 = vlaneseq
      %v349 = vshrl.u32 %v348, 7
      %v350 = vsub.s32 %v53, %v349
      %v351 = vrot.slane %v294, %v350
      %v352 = vlaneseq
      %v353 = vshrl.u32 %v352, 7
      %v354 = vsub.s32 %v53, %v353
      %v355 = vrot.slane %v297, %v354
      %v356 = vlaneseq
      %v357 = vshrl.u32 %v356, 7
      %v358 = vsub.s32 %v53, %v357
      %v359 = vrot.slane %v300, %v358
      %v360 = vlaneseq
      %v361 = vshrl.u32 %v360, 7
      %v362 = vsub.s32 %v53, %v361
      %v363 = vrot.slane %v303, %v362
      %v364 = vlaneseq
      %v365 = vshrl.u32 %v364, 7
      %v366 = vsub.s32 %v53, %v365
      %v367 = vrot.slane %v306, %v366
      %v368 = vlaneseq
      %v369 = vshrl.u32 %v368, 7
      %v370 = vsub.s32 %v53, %v369
      %v371 = vrot.slane %v309, %v370
      %v372 = vlaneseq
      %v373 = vshrl.u32 %v372, 7
      %v374 = vsub.s32 %v53, %v373
      %v375 = vrot.slane %v312, %v374
      %v376 = vlaneseq
      %v377 = vshrl.u32 %v376, 7
      %v378 = vsub.s32 %v53, %v377
      %v379 = vrot.slane %v315, %v378
      %v380 = vsel %vm62, %v323, %v319
      %vm381 = vcmask 1042434
      %v382 = vsel %vm381, %v327, %v380
      %vm383 = vcmask 1043459
      %v384 = vsel %vm383, %v331, %v382
      %vm385 = vcmask 1044484
      %v386 = vsel %vm385, %v335, %v384
      %vm387 = vcmask 1045509
      %v388 = vsel %vm387, %v339, %v386
      %vm389 = vcmask 1046534
      %v390 = vsel %vm389, %v343, %v388
      %vm391 = vcmask 1047559
      %v392 = vsel %vm391, %v347, %v390
      %v393 = vsel %vm62, %v355, %v351
      %v394 = vsel %vm381, %v359, %v393
      %v395 = vsel %vm383, %v363, %v394
      %v396 = vsel %vm385, %v367, %v395
      %v397 = vsel %vm387, %v371, %v396
      %v398 = vsel %vm389, %v375, %v397
      %v399 = vsel %vm391, %v379, %v398
      %v402 = vsel %vm43, %v392, 0.0
      %403 = vadd.xlane.f32.xlu0 %v402
      %v404 = vpop.xlane.xlu0 %403
      %v405 = vsel %vm43, %v399, 0.0
      %406 = vadd.xlane.f32.xlu0 %v405
      %v407 = vpop.xlane.xlu0 %406
      %v409 = vlaneseq
      %v410 = vshrl.u32 %v409, 7
      %v411 = vsub.s32 0, %v410
      %v412 = vrot.slane %v94, %v411
      %414 = vbcast.lane.b32.xlu0 %v412, 256
      %v415 = vpop.permute.xlu0 %414
      %v416 = vlaneseq
      %v417 = vshrl.u32 %v416, 7
      %v418 = vsub.s32 1, %v417
      %v419 = vrot.slane %v94, %v418
      %421 = vbcast.lane.b32.xlu0 %v419, 256
      %v422 = vpop.permute.xlu0 %421
      %v425 = vadd.f32 %v404, %v415
      %v426 = vadd.f32 %v407, %v422
      %429 = vset.pattern.permute.xlu0 0
      %430 = vperm.xlu0 %429, %v425
      %v431 = vpop.permute.xlu0 %430
      %432 = vset.pattern.permute.xlu0 0
      %433 = vperm.xlu0 %432, %v426
      %v434 = vpop.permute.xlu0 %433
      %v435 = vlaneseq
      %v436 = vshrl.u32 %v435, 7
      %v437 = vsub.s32 %v53, %v436
      %v438 = vrot.slane %v431, %v437
      %v439 = vlaneseq
      %v440 = vshrl.u32 %v439, 7
      %v441 = vsub.s32 %v53, %v440
      %v442 = vrot.slane %v434, %v441
      %v443 = vsel %vm62, %v442, %v438
      %v445 = vsel %vm65, %v443, inf
      %446 = vmin.xlane.f32.xlu0 %v445
      %v447 = vpop.xlane.xlu0 %446
      %v448 = vsub.f32 %v447, 1.0
      %v449 = vsel %vm65, %v443, -inf
      %450 = vmax.xlane.f32.xlu0 %v449
      %v451 = vpop.xlane.xlu0 %450
      %v452 = vadd.f32 %v448, %v451
      %v453 = vmul.f32 %v452, 0.5
      %v455 = vlaneseq
      %v456 = vshrl.u32 %v455, 7
      %v457 = vsub.s32 0, %v456
      %v458 = vrot.slane %v453, %v457
      %v459 = vlaneseq
      %v460 = vshrl.u32 %v459, 7
      %v461 = vsub.s32 1, %v460
      %v462 = vrot.slane %v453, %v461
      %v465 = vsub.f32 %v425, %v458
      %v466 = vsub.f32 %v426, %v462
      %v467 = vmax.f32 %v465, 0.0
      %v468 = vmax.f32 %v466, 0.0
      %471 = vset.pattern.permute.xlu0 0
      %472 = vperm.xlu0 %471, %v467
      %v473 = vpop.permute.xlu0 %472
      %474 = vset.pattern.permute.xlu0 0
      %475 = vperm.xlu0 %474, %v468
      %v476 = vpop.permute.xlu0 %475
      %v477 = vlaneseq
      %v478 = vshrl.u32 %v477, 7
      %v479 = vsub.s32 %v53, %v478
      %v480 = vrot.slane %v473, %v479
      %v481 = vlaneseq
      %v482 = vshrl.u32 %v481, 7
      %v483 = vsub.s32 %v53, %v482
      %v484 = vrot.slane %v476, %v483
      %v485 = vsel %vm62, %v484, %v480
      %v487 = vsel %vm65, %v485, 0.0
      %488 = vadd.xlane.f32.xlu0 %v487
      %v489 = vpop.xlane.xlu0 %488
      %vm490 = vcmp.gt.f32.partialorder %v489, 1.0
      %v491 = vsel %vm490, %v453, %v448
      %v492 = vsel %vm490, %v451, %v453
      %v493 = vadd.f32 %v491, %v492
      %v494 = vmul.f32 %v493, 0.5
      %v496 = vlaneseq
      %v497 = vshrl.u32 %v496, 7
      %v498 = vsub.s32 0, %v497
      %v499 = vrot.slane %v494, %v498
      %v500 = vlaneseq
      %v501 = vshrl.u32 %v500, 7
      %v502 = vsub.s32 1, %v501
      %v503 = vrot.slane %v494, %v502
      %v506 = vsub.f32 %v425, %v499
      %v507 = vsub.f32 %v426, %v503
      %v508 = vmax.f32 %v506, 0.0
      %v509 = vmax.f32 %v507, 0.0
      %512 = vset.pattern.permute.xlu0 0
      %513 = vperm.xlu0 %512, %v508
      %v514 = vpop.permute.xlu0 %513
      %515 = vset.pattern.permute.xlu0 0
      %516 = vperm.xlu0 %515, %v509
      %v517 = vpop.permute.xlu0 %516
      %v518 = vlaneseq
      %v519 = vshrl.u32 %v518, 7
      %v520 = vsub.s32 %v53, %v519
      %v521 = vrot.slane %v514, %v520
      %v522 = vlaneseq
      %v523 = vshrl.u32 %v522, 7
      %v524 = vsub.s32 %v53, %v523
      %v525 = vrot.slane %v517, %v524
      %v526 = vsel %vm62, %v525, %v521
      %v528 = vsel %vm65, %v526, 0.0
      %529 = vadd.xlane.f32.xlu0 %v528
      %v530 = vpop.xlane.xlu0 %529
      %vm531 = vcmp.gt.f32.partialorder %v530, 1.0
      %v532 = vsel %vm531, %v494, %v491
      %v533 = vsel %vm531, %v492, %v494
      %v534 = vadd.f32 %v532, %v533
      %v535 = vmul.f32 %v534, 0.5
      %v537 = vlaneseq
      %v538 = vshrl.u32 %v537, 7
      %v539 = vsub.s32 0, %v538
      %v540 = vrot.slane %v535, %v539
      %v541 = vlaneseq
      %v542 = vshrl.u32 %v541, 7
      %v543 = vsub.s32 1, %v542
      %v544 = vrot.slane %v535, %v543
      %v547 = vsub.f32 %v425, %v540
      %v548 = vsub.f32 %v426, %v544
      %v549 = vmax.f32 %v547, 0.0
      %v550 = vmax.f32 %v548, 0.0
      %553 = vset.pattern.permute.xlu0 0
      %554 = vperm.xlu0 %553, %v549
      %v555 = vpop.permute.xlu0 %554
      %556 = vset.pattern.permute.xlu0 0
      %557 = vperm.xlu0 %556, %v550
      %v558 = vpop.permute.xlu0 %557
      %v559 = vlaneseq
      %v560 = vshrl.u32 %v559, 7
      %v561 = vsub.s32 %v53, %v560
      %v562 = vrot.slane %v555, %v561
      %v563 = vlaneseq
      %v564 = vshrl.u32 %v563, 7
      %v565 = vsub.s32 %v53, %v564
      %v566 = vrot.slane %v558, %v565
      %v567 = vsel %vm62, %v566, %v562
      %v569 = vsel %vm65, %v567, 0.0
      %570 = vadd.xlane.f32.xlu0 %v569
      %v571 = vpop.xlane.xlu0 %570
      %vm572 = vcmp.gt.f32.partialorder %v571, 1.0
      %v573 = vsel %vm572, %v535, %v532
      %v574 = vsel %vm572, %v533, %v535
      %v575 = vadd.f32 %v573, %v574
      %v576 = vmul.f32 %v575, 0.5
      %v578 = vlaneseq
      %v579 = vshrl.u32 %v578, 7
      %v580 = vsub.s32 0, %v579
      %v581 = vrot.slane %v576, %v580
      %v582 = vlaneseq
      %v583 = vshrl.u32 %v582, 7
      %v584 = vsub.s32 1, %v583
      %v585 = vrot.slane %v576, %v584
      %v588 = vsub.f32 %v425, %v581
      %v589 = vsub.f32 %v426, %v585
      %v590 = vmax.f32 %v588, 0.0
      %v591 = vmax.f32 %v589, 0.0
      %594 = vset.pattern.permute.xlu0 0
      %595 = vperm.xlu0 %594, %v590
      %v596 = vpop.permute.xlu0 %595
      %597 = vset.pattern.permute.xlu0 0
      %598 = vperm.xlu0 %597, %v591
      %v599 = vpop.permute.xlu0 %598
      %v600 = vlaneseq
      %v601 = vshrl.u32 %v600, 7
      %v602 = vsub.s32 %v53, %v601
      %v603 = vrot.slane %v596, %v602
      %v604 = vlaneseq
      %v605 = vshrl.u32 %v604, 7
      %v606 = vsub.s32 %v53, %v605
      %v607 = vrot.slane %v599, %v606
      %v608 = vsel %vm62, %v607, %v603
      %v610 = vsel %vm65, %v608, 0.0
      %611 = vadd.xlane.f32.xlu0 %v610
      %v612 = vpop.xlane.xlu0 %611
      %vm613 = vcmp.gt.f32.partialorder %v612, 1.0
      %v614 = vsel %vm613, %v576, %v573
      %v615 = vsel %vm613, %v574, %v576
      %v616 = vadd.f32 %v614, %v615
      %v617 = vmul.f32 %v616, 0.5
      %v619 = vlaneseq
      %v620 = vshrl.u32 %v619, 7
      %v621 = vsub.s32 0, %v620
      %v622 = vrot.slane %v617, %v621
      %v623 = vlaneseq
      %v624 = vshrl.u32 %v623, 7
      %v625 = vsub.s32 1, %v624
      %v626 = vrot.slane %v617, %v625
      %v629 = vsub.f32 %v425, %v622
      %v630 = vsub.f32 %v426, %v626
      %v631 = vmax.f32 %v629, 0.0
      %v632 = vmax.f32 %v630, 0.0
      %635 = vset.pattern.permute.xlu0 0
      %636 = vperm.xlu0 %635, %v631
      %v637 = vpop.permute.xlu0 %636
      %638 = vset.pattern.permute.xlu0 0
      %639 = vperm.xlu0 %638, %v632
      %v640 = vpop.permute.xlu0 %639
      %v641 = vlaneseq
      %v642 = vshrl.u32 %v641, 7
      %v643 = vsub.s32 %v53, %v642
      %v644 = vrot.slane %v637, %v643
      %v645 = vlaneseq
      %v646 = vshrl.u32 %v645, 7
      %v647 = vsub.s32 %v53, %v646
      %v648 = vrot.slane %v640, %v647
      %v649 = vsel %vm62, %v648, %v644
      %v651 = vsel %vm65, %v649, 0.0
      %652 = vadd.xlane.f32.xlu0 %v651
      %v653 = vpop.xlane.xlu0 %652
      %vm654 = vcmp.gt.f32.partialorder %v653, 1.0
      %v655 = vsel %vm654, %v617, %v614
      %v656 = vsel %vm654, %v615, %v617
      %v657 = vadd.f32 %v655, %v656
      %v658 = vmul.f32 %v657, 0.5
      %v660 = vlaneseq
      %v661 = vshrl.u32 %v660, 7
      %v662 = vsub.s32 0, %v661
      %v663 = vrot.slane %v658, %v662
      %v664 = vlaneseq
      %v665 = vshrl.u32 %v664, 7
      %v666 = vsub.s32 1, %v665
      %v667 = vrot.slane %v658, %v666
      %v670 = vsub.f32 %v425, %v663
      %v671 = vsub.f32 %v426, %v667
      %v672 = vmax.f32 %v670, 0.0
      %v673 = vmax.f32 %v671, 0.0
      %676 = vset.pattern.permute.xlu0 0
      %677 = vperm.xlu0 %676, %v672
      %v678 = vpop.permute.xlu0 %677
      %679 = vset.pattern.permute.xlu0 0
      %680 = vperm.xlu0 %679, %v673
      %v681 = vpop.permute.xlu0 %680
      %v682 = vlaneseq
      %v683 = vshrl.u32 %v682, 7
      %v684 = vsub.s32 %v53, %v683
      %v685 = vrot.slane %v678, %v684
      %v686 = vlaneseq
      %v687 = vshrl.u32 %v686, 7
      %v688 = vsub.s32 %v53, %v687
      %v689 = vrot.slane %v681, %v688
      %v690 = vsel %vm62, %v689, %v685
      %v692 = vsel %vm65, %v690, 0.0
      %693 = vadd.xlane.f32.xlu0 %v692
      %v694 = vpop.xlane.xlu0 %693
      %vm695 = vcmp.gt.f32.partialorder %v694, 1.0
      %v696 = vsel %vm695, %v658, %v655
      %v697 = vsel %vm695, %v656, %v658
      %v698 = vadd.f32 %v696, %v697
      %v699 = vmul.f32 %v698, 0.5
      %v701 = vlaneseq
      %v702 = vshrl.u32 %v701, 7
      %v703 = vsub.s32 0, %v702
      %v704 = vrot.slane %v699, %v703
      %v705 = vlaneseq
      %v706 = vshrl.u32 %v705, 7
      %v707 = vsub.s32 1, %v706
      %v708 = vrot.slane %v699, %v707
      %v711 = vsub.f32 %v425, %v704
      %v712 = vsub.f32 %v426, %v708
      %v713 = vmax.f32 %v711, 0.0
      %v714 = vmax.f32 %v712, 0.0
      %717 = vset.pattern.permute.xlu0 0
      %718 = vperm.xlu0 %717, %v713
      %v719 = vpop.permute.xlu0 %718
      %720 = vset.pattern.permute.xlu0 0
      %721 = vperm.xlu0 %720, %v714
      %v722 = vpop.permute.xlu0 %721
      %v723 = vlaneseq
      %v724 = vshrl.u32 %v723, 7
      %v725 = vsub.s32 %v53, %v724
      %v726 = vrot.slane %v719, %v725
      %v727 = vlaneseq
      %v728 = vshrl.u32 %v727, 7
      %v729 = vsub.s32 %v53, %v728
      %v730 = vrot.slane %v722, %v729
      %v731 = vsel %vm62, %v730, %v726
      %v733 = vsel %vm65, %v731, 0.0
      %734 = vadd.xlane.f32.xlu0 %v733
      %v735 = vpop.xlane.xlu0 %734
      %vm736 = vcmp.gt.f32.partialorder %v735, 1.0
      %v737 = vsel %vm736, %v699, %v696
      %v738 = vsel %vm736, %v697, %v699
      %v739 = vadd.f32 %v737, %v738
      %v740 = vmul.f32 %v739, 0.5
      %v742 = vlaneseq
      %v743 = vshrl.u32 %v742, 7
      %v744 = vsub.s32 0, %v743
      %v745 = vrot.slane %v740, %v744
      %v746 = vlaneseq
      %v747 = vshrl.u32 %v746, 7
      %v748 = vsub.s32 1, %v747
      %v749 = vrot.slane %v740, %v748
      %v752 = vsub.f32 %v425, %v745
      %v753 = vsub.f32 %v426, %v749
      %v754 = vmax.f32 %v752, 0.0
      %v755 = vmax.f32 %v753, 0.0
      %758 = vset.pattern.permute.xlu0 0
      %759 = vperm.xlu0 %758, %v754
      %v760 = vpop.permute.xlu0 %759
      %761 = vset.pattern.permute.xlu0 0
      %762 = vperm.xlu0 %761, %v755
      %v763 = vpop.permute.xlu0 %762
      %v764 = vlaneseq
      %v765 = vshrl.u32 %v764, 7
      %v766 = vsub.s32 %v53, %v765
      %v767 = vrot.slane %v760, %v766
      %v768 = vlaneseq
      %v769 = vshrl.u32 %v768, 7
      %v770 = vsub.s32 %v53, %v769
      %v771 = vrot.slane %v763, %v770
      %v772 = vsel %vm62, %v771, %v767
      %v774 = vsel %vm65, %v772, 0.0
      %775 = vadd.xlane.f32.xlu0 %v774
      %v776 = vpop.xlane.xlu0 %775
      %vm777 = vcmp.gt.f32.partialorder %v776, 1.0
      %v778 = vsel %vm777, %v740, %v737
      %v779 = vsel %vm777, %v738, %v740
      %v780 = vadd.f32 %v778, %v779
      %v781 = vmul.f32 %v780, 0.5
      %v783 = vlaneseq
      %v784 = vshrl.u32 %v783, 7
      %v785 = vsub.s32 0, %v784
      %v786 = vrot.slane %v781, %v785
      %v787 = vlaneseq
      %v788 = vshrl.u32 %v787, 7
      %v789 = vsub.s32 1, %v788
      %v790 = vrot.slane %v781, %v789
      %v793 = vsub.f32 %v425, %v786
      %v794 = vsub.f32 %v426, %v790
      %v795 = vmax.f32 %v793, 0.0
      %v796 = vmax.f32 %v794, 0.0
      %799 = vset.pattern.permute.xlu0 0
      %800 = vperm.xlu0 %799, %v795
      %v801 = vpop.permute.xlu0 %800
      %802 = vset.pattern.permute.xlu0 0
      %803 = vperm.xlu0 %802, %v796
      %v804 = vpop.permute.xlu0 %803
      %v805 = vlaneseq
      %v806 = vshrl.u32 %v805, 7
      %v807 = vsub.s32 %v53, %v806
      %v808 = vrot.slane %v801, %v807
      %v809 = vlaneseq
      %v810 = vshrl.u32 %v809, 7
      %v811 = vsub.s32 %v53, %v810
      %v812 = vrot.slane %v804, %v811
      %v813 = vsel %vm62, %v812, %v808
      %v815 = vsel %vm65, %v813, 0.0
      %816 = vadd.xlane.f32.xlu0 %v815
      %v817 = vpop.xlane.xlu0 %816
      %vm818 = vcmp.gt.f32.partialorder %v817, 1.0
      %v819 = vsel %vm818, %v781, %v778
      %v820 = vsel %vm818, %v779, %v781
      %v821 = vadd.f32 %v819, %v820
      %v822 = vmul.f32 %v821, 0.5
      %v824 = vlaneseq
      %v825 = vshrl.u32 %v824, 7
      %v826 = vsub.s32 0, %v825
      %v827 = vrot.slane %v822, %v826
      %v828 = vlaneseq
      %v829 = vshrl.u32 %v828, 7
      %v830 = vsub.s32 1, %v829
      %v831 = vrot.slane %v822, %v830
      %v834 = vsub.f32 %v425, %v827
      %v835 = vsub.f32 %v426, %v831
      %v836 = vmax.f32 %v834, 0.0
      %v837 = vmax.f32 %v835, 0.0
      %840 = vset.pattern.permute.xlu0 0
      %841 = vperm.xlu0 %840, %v836
      %v842 = vpop.permute.xlu0 %841
      %843 = vset.pattern.permute.xlu0 0
      %844 = vperm.xlu0 %843, %v837
      %v845 = vpop.permute.xlu0 %844
      %v846 = vlaneseq
      %v847 = vshrl.u32 %v846, 7
      %v848 = vsub.s32 %v53, %v847
      %v849 = vrot.slane %v842, %v848
      %v850 = vlaneseq
      %v851 = vshrl.u32 %v850, 7
      %v852 = vsub.s32 %v53, %v851
      %v853 = vrot.slane %v845, %v852
      %v854 = vsel %vm62, %v853, %v849
      %v856 = vsel %vm65, %v854, 0.0
      %857 = vadd.xlane.f32.xlu0 %v856
      %v858 = vpop.xlane.xlu0 %857
      %vm859 = vcmp.gt.f32.partialorder %v858, 1.0
      %v860 = vsel %vm859, %v822, %v819
      %v861 = vsel %vm859, %v820, %v822
      %v862 = vadd.f32 %v860, %v861
      %v863 = vmul.f32 %v862, 0.5
      %v865 = vlaneseq
      %v866 = vshrl.u32 %v865, 7
      %v867 = vsub.s32 0, %v866
      %v868 = vrot.slane %v863, %v867
      %v869 = vlaneseq
      %v870 = vshrl.u32 %v869, 7
      %v871 = vsub.s32 1, %v870
      %v872 = vrot.slane %v863, %v871
      %v875 = vsub.f32 %v425, %v868
      %v876 = vsub.f32 %v426, %v872
      %v877 = vmax.f32 %v875, 0.0
      %v878 = vmax.f32 %v876, 0.0
      %881 = vset.pattern.permute.xlu0 0
      %882 = vperm.xlu0 %881, %v877
      %v883 = vpop.permute.xlu0 %882
      %884 = vset.pattern.permute.xlu0 0
      %885 = vperm.xlu0 %884, %v878
      %v886 = vpop.permute.xlu0 %885
      %v887 = vlaneseq
      %v888 = vshrl.u32 %v887, 7
      %v889 = vsub.s32 %v53, %v888
      %v890 = vrot.slane %v883, %v889
      %v891 = vlaneseq
      %v892 = vshrl.u32 %v891, 7
      %v893 = vsub.s32 %v53, %v892
      %v894 = vrot.slane %v886, %v893
      %v895 = vsel %vm62, %v894, %v890
      %v897 = vsel %vm65, %v895, 0.0
      %898 = vadd.xlane.f32.xlu0 %v897
      %v899 = vpop.xlane.xlu0 %898
      %vm900 = vcmp.gt.f32.partialorder %v899, 1.0
      %v901 = vsel %vm900, %v863, %v860
      %v902 = vsel %vm900, %v861, %v863
      %v903 = vadd.f32 %v901, %v902
      %v904 = vmul.f32 %v903, 0.5
      %v906 = vlaneseq
      %v907 = vshrl.u32 %v906, 7
      %v908 = vsub.s32 0, %v907
      %v909 = vrot.slane %v904, %v908
      %v910 = vlaneseq
      %v911 = vshrl.u32 %v910, 7
      %v912 = vsub.s32 1, %v911
      %v913 = vrot.slane %v904, %v912
      %v916 = vsub.f32 %v425, %v909
      %v917 = vsub.f32 %v426, %v913
      %v918 = vmax.f32 %v916, 0.0
      %v919 = vmax.f32 %v917, 0.0
      %922 = vset.pattern.permute.xlu0 0
      %923 = vperm.xlu0 %922, %v918
      %v924 = vpop.permute.xlu0 %923
      %925 = vset.pattern.permute.xlu0 0
      %926 = vperm.xlu0 %925, %v919
      %v927 = vpop.permute.xlu0 %926
      %v928 = vlaneseq
      %v929 = vshrl.u32 %v928, 7
      %v930 = vsub.s32 %v53, %v929
      %v931 = vrot.slane %v924, %v930
      %v932 = vlaneseq
      %v933 = vshrl.u32 %v932, 7
      %v934 = vsub.s32 %v53, %v933
      %v935 = vrot.slane %v927, %v934
      %v936 = vsel %vm62, %v935, %v931
      %v938 = vsel %vm65, %v936, 0.0
      %939 = vadd.xlane.f32.xlu0 %v938
      %v940 = vpop.xlane.xlu0 %939
      %vm941 = vcmp.gt.f32.partialorder %v940, 1.0
      %v942 = vsel %vm941, %v904, %v901
      %v943 = vsel %vm941, %v902, %v904
      %v944 = vadd.f32 %v942, %v943
      %v945 = vmul.f32 %v944, 0.5
      %v947 = vlaneseq
      %v948 = vshrl.u32 %v947, 7
      %v949 = vsub.s32 0, %v948
      %v950 = vrot.slane %v945, %v949
      %v951 = vlaneseq
      %v952 = vshrl.u32 %v951, 7
      %v953 = vsub.s32 1, %v952
      %v954 = vrot.slane %v945, %v953
      %v957 = vsub.f32 %v425, %v950
      %v958 = vsub.f32 %v426, %v954
      %v959 = vmax.f32 %v957, 0.0
      %v960 = vmax.f32 %v958, 0.0
      %963 = vset.pattern.permute.xlu0 0
      %964 = vperm.xlu0 %963, %v959
      %v965 = vpop.permute.xlu0 %964
      %966 = vset.pattern.permute.xlu0 0
      %967 = vperm.xlu0 %966, %v960
      %v968 = vpop.permute.xlu0 %967
      %v969 = vlaneseq
      %v970 = vshrl.u32 %v969, 7
      %v971 = vsub.s32 %v53, %v970
      %v972 = vrot.slane %v965, %v971
      %v973 = vlaneseq
      %v974 = vshrl.u32 %v973, 7
      %v975 = vsub.s32 %v53, %v974
      %v976 = vrot.slane %v968, %v975
      %v977 = vsel %vm62, %v976, %v972
      %v979 = vsel %vm65, %v977, 0.0
      %980 = vadd.xlane.f32.xlu0 %v979
      %v981 = vpop.xlane.xlu0 %980
      %vm982 = vcmp.gt.f32.partialorder %v981, 1.0
      %v983 = vsel %vm982, %v945, %v942
      %v984 = vsel %vm982, %v943, %v945
      %v985 = vadd.f32 %v983, %v984
      %v986 = vmul.f32 %v985, 0.5
      %v988 = vlaneseq
      %v989 = vshrl.u32 %v988, 7
      %v990 = vsub.s32 0, %v989
      %v991 = vrot.slane %v986, %v990
      %v992 = vlaneseq
      %v993 = vshrl.u32 %v992, 7
      %v994 = vsub.s32 1, %v993
      %v995 = vrot.slane %v986, %v994
      %v998 = vsub.f32 %v425, %v991
      %v999 = vsub.f32 %v426, %v995
      %v1000 = vmax.f32 %v998, 0.0
      %v1001 = vmax.f32 %v999, 0.0
      %1004 = vset.pattern.permute.xlu0 0
      %1005 = vperm.xlu0 %1004, %v1000
      %v1006 = vpop.permute.xlu0 %1005
      %1007 = vset.pattern.permute.xlu0 0
      %1008 = vperm.xlu0 %1007, %v1001
      %v1009 = vpop.permute.xlu0 %1008
      %v1010 = vlaneseq
      %v1011 = vshrl.u32 %v1010, 7
      %v1012 = vsub.s32 %v53, %v1011
      %v1013 = vrot.slane %v1006, %v1012
      %v1014 = vlaneseq
      %v1015 = vshrl.u32 %v1014, 7
      %v1016 = vsub.s32 %v53, %v1015
      %v1017 = vrot.slane %v1009, %v1016
      %v1018 = vsel %vm62, %v1017, %v1013
      %v1020 = vsel %vm65, %v1018, 0.0
      %1021 = vadd.xlane.f32.xlu0 %v1020
      %v1022 = vpop.xlane.xlu0 %1021
      %vm1023 = vcmp.gt.f32.partialorder %v1022, 1.0
      %v1024 = vsel %vm1023, %v986, %v983
      %v1025 = vsel %vm1023, %v984, %v986
      %v1026 = vadd.f32 %v1024, %v1025
      %v1027 = vmul.f32 %v1026, 0.5
      %v1029 = vlaneseq
      %v1030 = vshrl.u32 %v1029, 7
      %v1031 = vsub.s32 0, %v1030
      %v1032 = vrot.slane %v1027, %v1031
      %v1033 = vlaneseq
      %v1034 = vshrl.u32 %v1033, 7
      %v1035 = vsub.s32 1, %v1034
      %v1036 = vrot.slane %v1027, %v1035
      %v1039 = vsub.f32 %v425, %v1032
      %v1040 = vsub.f32 %v426, %v1036
      %v1041 = vmax.f32 %v1039, 0.0
      %v1042 = vmax.f32 %v1040, 0.0
      %1045 = vset.pattern.permute.xlu0 0
      %1046 = vperm.xlu0 %1045, %v1041
      %v1047 = vpop.permute.xlu0 %1046
      %1048 = vset.pattern.permute.xlu0 0
      %1049 = vperm.xlu0 %1048, %v1042
      %v1050 = vpop.permute.xlu0 %1049
      %v1051 = vlaneseq
      %v1052 = vshrl.u32 %v1051, 7
      %v1053 = vsub.s32 %v53, %v1052
      %v1054 = vrot.slane %v1047, %v1053
      %v1055 = vlaneseq
      %v1056 = vshrl.u32 %v1055, 7
      %v1057 = vsub.s32 %v53, %v1056
      %v1058 = vrot.slane %v1050, %v1057
      %v1059 = vsel %vm62, %v1058, %v1054
      %v1061 = vsel %vm65, %v1059, 0.0
      %1062 = vadd.xlane.f32.xlu0 %v1061
      %v1063 = vpop.xlane.xlu0 %1062
      %vm1064 = vcmp.gt.f32.partialorder %v1063, 1.0
      %v1065 = vsel %vm1064, %v1027, %v1024
      %v1066 = vsel %vm1064, %v1025, %v1027
      %v1067 = vadd.f32 %v1065, %v1066
      %v1068 = vmul.f32 %v1067, 0.5
      %v1070 = vlaneseq
      %v1071 = vshrl.u32 %v1070, 7
      %v1072 = vsub.s32 0, %v1071
      %v1073 = vrot.slane %v1068, %v1072
      %v1074 = vlaneseq
      %v1075 = vshrl.u32 %v1074, 7
      %v1076 = vsub.s32 1, %v1075
      %v1077 = vrot.slane %v1068, %v1076
      %v1080 = vsub.f32 %v425, %v1073
      %v1081 = vsub.f32 %v426, %v1077
      %v1082 = vmax.f32 %v1080, 0.0
      %v1083 = vmax.f32 %v1081, 0.0
      %1086 = vset.pattern.permute.xlu0 0
      %1087 = vperm.xlu0 %1086, %v1082
      %v1088 = vpop.permute.xlu0 %1087
      %1089 = vset.pattern.permute.xlu0 0
      %1090 = vperm.xlu0 %1089, %v1083
      %v1091 = vpop.permute.xlu0 %1090
      %v1092 = vlaneseq
      %v1093 = vshrl.u32 %v1092, 7
      %v1094 = vsub.s32 %v53, %v1093
      %v1095 = vrot.slane %v1088, %v1094
      %v1096 = vlaneseq
      %v1097 = vshrl.u32 %v1096, 7
      %v1098 = vsub.s32 %v53, %v1097
      %v1099 = vrot.slane %v1091, %v1098
      %v1100 = vsel %vm62, %v1099, %v1095
      %v1102 = vsel %vm65, %v1100, 0.0
      %1103 = vadd.xlane.f32.xlu0 %v1102
      %v1104 = vpop.xlane.xlu0 %1103
      %vm1105 = vcmp.gt.f32.partialorder %v1104, 1.0
      %v1106 = vsel %vm1105, %v1068, %v1065
      %v1107 = vsel %vm1105, %v1066, %v1068
      %v1108 = vadd.f32 %v1106, %v1107
      %v1109 = vmul.f32 %v1108, 0.5
      %v1111 = vlaneseq
      %v1112 = vshrl.u32 %v1111, 7
      %v1113 = vsub.s32 0, %v1112
      %v1114 = vrot.slane %v1109, %v1113
      %v1115 = vlaneseq
      %v1116 = vshrl.u32 %v1115, 7
      %v1117 = vsub.s32 1, %v1116
      %v1118 = vrot.slane %v1109, %v1117
      %v1121 = vsub.f32 %v425, %v1114
      %v1122 = vsub.f32 %v426, %v1118
      %v1123 = vmax.f32 %v1121, 0.0
      %v1124 = vmax.f32 %v1122, 0.0
      %1127 = vset.pattern.permute.xlu0 0
      %1128 = vperm.xlu0 %1127, %v1123
      %v1129 = vpop.permute.xlu0 %1128
      %1130 = vset.pattern.permute.xlu0 0
      %1131 = vperm.xlu0 %1130, %v1124
      %v1132 = vpop.permute.xlu0 %1131
      %v1133 = vlaneseq
      %v1134 = vshrl.u32 %v1133, 7
      %v1135 = vsub.s32 %v53, %v1134
      %v1136 = vrot.slane %v1129, %v1135
      %v1137 = vlaneseq
      %v1138 = vshrl.u32 %v1137, 7
      %v1139 = vsub.s32 %v53, %v1138
      %v1140 = vrot.slane %v1132, %v1139
      %v1141 = vsel %vm62, %v1140, %v1136
      %v1143 = vsel %vm65, %v1141, 0.0
      %1144 = vadd.xlane.f32.xlu0 %v1143
      %v1145 = vpop.xlane.xlu0 %1144
      %vm1146 = vcmp.gt.f32.partialorder %v1145, 1.0
      %v1147 = vsel %vm1146, %v1109, %v1106
      %v1148 = vsel %vm1146, %v1107, %v1109
      %v1149 = vadd.f32 %v1147, %v1148
      %v1150 = vmul.f32 %v1149, 0.5
      %v1152 = vlaneseq
      %v1153 = vshrl.u32 %v1152, 7
      %v1154 = vsub.s32 0, %v1153
      %v1155 = vrot.slane %v1150, %v1154
      %v1156 = vlaneseq
      %v1157 = vshrl.u32 %v1156, 7
      %v1158 = vsub.s32 1, %v1157
      %v1159 = vrot.slane %v1150, %v1158
      %v1162 = vsub.f32 %v425, %v1155
      %v1163 = vsub.f32 %v426, %v1159
      %v1164 = vmax.f32 %v1162, 0.0
      %v1165 = vmax.f32 %v1163, 0.0
      %1168 = vset.pattern.permute.xlu0 0
      %1169 = vperm.xlu0 %1168, %v1164
      %v1170 = vpop.permute.xlu0 %1169
      %1171 = vset.pattern.permute.xlu0 0
      %1172 = vperm.xlu0 %1171, %v1165
      %v1173 = vpop.permute.xlu0 %1172
      %v1174 = vlaneseq
      %v1175 = vshrl.u32 %v1174, 7
      %v1176 = vsub.s32 %v53, %v1175
      %v1177 = vrot.slane %v1170, %v1176
      %v1178 = vlaneseq
      %v1179 = vshrl.u32 %v1178, 7
      %v1180 = vsub.s32 %v53, %v1179
      %v1181 = vrot.slane %v1173, %v1180
      %v1182 = vsel %vm62, %v1181, %v1177
      %v1184 = vsel %vm65, %v1182, 0.0
      %1185 = vadd.xlane.f32.xlu0 %v1184
      %v1186 = vpop.xlane.xlu0 %1185
      %vm1187 = vcmp.gt.f32.partialorder %v1186, 1.0
      %v1188 = vsel %vm1187, %v1150, %v1147
      %v1189 = vsel %vm1187, %v1148, %v1150
      %v1190 = vadd.f32 %v1188, %v1189
      %v1191 = vmul.f32 %v1190, 0.5
      %v1193 = vlaneseq
      %v1194 = vshrl.u32 %v1193, 7
      %v1195 = vsub.s32 0, %v1194
      %v1196 = vrot.slane %v1191, %v1195
      %v1197 = vlaneseq
      %v1198 = vshrl.u32 %v1197, 7
      %v1199 = vsub.s32 1, %v1198
      %v1200 = vrot.slane %v1191, %v1199
      %v1203 = vsub.f32 %v425, %v1196
      %v1204 = vsub.f32 %v426, %v1200
      %v1205 = vmax.f32 %v1203, 0.0
      %v1206 = vmax.f32 %v1204, 0.0
      %1209 = vset.pattern.permute.xlu0 0
      %1210 = vperm.xlu0 %1209, %v1205
      %v1211 = vpop.permute.xlu0 %1210
      %1212 = vset.pattern.permute.xlu0 0
      %1213 = vperm.xlu0 %1212, %v1206
      %v1214 = vpop.permute.xlu0 %1213
      %v1215 = vlaneseq
      %v1216 = vshrl.u32 %v1215, 7
      %v1217 = vsub.s32 %v53, %v1216
      %v1218 = vrot.slane %v1211, %v1217
      %v1219 = vlaneseq
      %v1220 = vshrl.u32 %v1219, 7
      %v1221 = vsub.s32 %v53, %v1220
      %v1222 = vrot.slane %v1214, %v1221
      %v1223 = vsel %vm62, %v1222, %v1218
      %v1225 = vsel %vm65, %v1223, 0.0
      %1226 = vadd.xlane.f32.xlu0 %v1225
      %v1227 = vpop.xlane.xlu0 %1226
      %vm1228 = vcmp.gt.f32.partialorder %v1227, 1.0
      %v1229 = vsel %vm1228, %v1191, %v1188
      %v1230 = vsel %vm1228, %v1189, %v1191
      %v1231 = vadd.f32 %v1229, %v1230
      %v1232 = vmul.f32 %v1231, 0.5
      %v1234 = vlaneseq
      %v1235 = vshrl.u32 %v1234, 7
      %v1236 = vsub.s32 0, %v1235
      %v1237 = vrot.slane %v1232, %v1236
      %v1238 = vlaneseq
      %v1239 = vshrl.u32 %v1238, 7
      %v1240 = vsub.s32 1, %v1239
      %v1241 = vrot.slane %v1232, %v1240
      %v1244 = vsub.f32 %v425, %v1237
      %v1245 = vsub.f32 %v426, %v1241
      %v1246 = vmax.f32 %v1244, 0.0
      %v1247 = vmax.f32 %v1245, 0.0
      %1250 = vset.pattern.permute.xlu0 0
      %1251 = vperm.xlu0 %1250, %v1246
      %v1252 = vpop.permute.xlu0 %1251
      %1253 = vset.pattern.permute.xlu0 0
      %1254 = vperm.xlu0 %1253, %v1247
      %v1255 = vpop.permute.xlu0 %1254
      %v1256 = vlaneseq
      %v1257 = vshrl.u32 %v1256, 7
      %v1258 = vsub.s32 %v53, %v1257
      %v1259 = vrot.slane %v1252, %v1258
      %v1260 = vlaneseq
      %v1261 = vshrl.u32 %v1260, 7
      %v1262 = vsub.s32 %v53, %v1261
      %v1263 = vrot.slane %v1255, %v1262
      %v1264 = vsel %vm62, %v1263, %v1259
      %v1266 = vsel %vm65, %v1264, 0.0
      %1267 = vadd.xlane.f32.xlu0 %v1266
      %v1268 = vpop.xlane.xlu0 %1267
      %vm1269 = vcmp.gt.f32.partialorder %v1268, 1.0
      %v1270 = vsel %vm1269, %v1232, %v1229
      %v1271 = vsel %vm1269, %v1230, %v1232
      %v1272 = vadd.f32 %v1270, %v1271
      %v1273 = vmul.f32 %v1272, 0.5
      %v1275 = vlaneseq
      %v1276 = vshrl.u32 %v1275, 7
      %v1277 = vsub.s32 0, %v1276
      %v1278 = vrot.slane %v1273, %v1277
      %v1279 = vlaneseq
      %v1280 = vshrl.u32 %v1279, 7
      %v1281 = vsub.s32 1, %v1280
      %v1282 = vrot.slane %v1273, %v1281
      %v1285 = vsub.f32 %v425, %v1278
      %v1286 = vsub.f32 %v426, %v1282
      %v1287 = vmax.f32 %v1285, 0.0
      %v1288 = vmax.f32 %v1286, 0.0
      %1291 = vset.pattern.permute.xlu0 0
      %1292 = vperm.xlu0 %1291, %v1287
      %v1293 = vpop.permute.xlu0 %1292
      %1294 = vset.pattern.permute.xlu0 0
      %1295 = vperm.xlu0 %1294, %v1288
      %v1296 = vpop.permute.xlu0 %1295
      %v1297 = vlaneseq
      %v1298 = vshrl.u32 %v1297, 7
      %v1299 = vsub.s32 %v53, %v1298
      %v1300 = vrot.slane %v1293, %v1299
      %v1301 = vlaneseq
      %v1302 = vshrl.u32 %v1301, 7
      %v1303 = vsub.s32 %v53, %v1302
      %v1304 = vrot.slane %v1296, %v1303
      %v1305 = vsel %vm62, %v1304, %v1300
      %v1307 = vsel %vm65, %v1305, 0.0
      %1308 = vadd.xlane.f32.xlu0 %v1307
      %v1309 = vpop.xlane.xlu0 %1308
      %vm1310 = vcmp.gt.f32.partialorder %v1309, 1.0
      %v1311 = vsel %vm1310, %v1273, %v1270
      %v1312 = vsel %vm1310, %v1271, %v1273
      %v1313 = vadd.f32 %v1311, %v1312
      %v1314 = vmul.f32 %v1313, 0.5
      %v1316 = vlaneseq
      %v1317 = vshrl.u32 %v1316, 7
      %v1318 = vsub.s32 0, %v1317
      %v1319 = vrot.slane %v1314, %v1318
      %v1320 = vlaneseq
      %v1321 = vshrl.u32 %v1320, 7
      %v1322 = vsub.s32 1, %v1321
      %v1323 = vrot.slane %v1314, %v1322
      %v1326 = vsub.f32 %v425, %v1319
      %v1327 = vsub.f32 %v426, %v1323
      %v1328 = vmax.f32 %v1326, 0.0
      %v1329 = vmax.f32 %v1327, 0.0
      %1332 = vset.pattern.permute.xlu0 0
      %1333 = vperm.xlu0 %1332, %v1328
      %v1334 = vpop.permute.xlu0 %1333
      %1335 = vset.pattern.permute.xlu0 0
      %1336 = vperm.xlu0 %1335, %v1329
      %v1337 = vpop.permute.xlu0 %1336
      %v1338 = vlaneseq
      %v1339 = vshrl.u32 %v1338, 7
      %v1340 = vsub.s32 %v53, %v1339
      %v1341 = vrot.slane %v1334, %v1340
      %v1342 = vlaneseq
      %v1343 = vshrl.u32 %v1342, 7
      %v1344 = vsub.s32 %v53, %v1343
      %v1345 = vrot.slane %v1337, %v1344
      %v1346 = vsel %vm62, %v1345, %v1341
      %v1348 = vsel %vm65, %v1346, 0.0
      %1349 = vadd.xlane.f32.xlu0 %v1348
      %v1350 = vpop.xlane.xlu0 %1349
      %vm1351 = vcmp.gt.f32.partialorder %v1350, 1.0
      %v1352 = vsel %vm1351, %v1314, %v1311
      %v1353 = vsel %vm1351, %v1312, %v1314
      %v1354 = vadd.f32 %v1352, %v1353
      %v1355 = vmul.f32 %v1354, 0.5
      %v1357 = vlaneseq
      %v1358 = vshrl.u32 %v1357, 7
      %v1359 = vsub.s32 0, %v1358
      %v1360 = vrot.slane %v1355, %v1359
      %v1361 = vlaneseq
      %v1362 = vshrl.u32 %v1361, 7
      %v1363 = vsub.s32 1, %v1362
      %v1364 = vrot.slane %v1355, %v1363
      %v1367 = vsub.f32 %v425, %v1360
      %v1368 = vsub.f32 %v426, %v1364
      %v1369 = vmax.f32 %v1367, 0.0
      %v1370 = vmax.f32 %v1368, 0.0
      %1373 = vset.pattern.permute.xlu0 0
      %1374 = vperm.xlu0 %1373, %v1369
      %v1375 = vpop.permute.xlu0 %1374
      %1376 = vset.pattern.permute.xlu0 0
      %1377 = vperm.xlu0 %1376, %v1370
      %v1378 = vpop.permute.xlu0 %1377
      %v1379 = vlaneseq
      %v1380 = vshrl.u32 %v1379, 7
      %v1381 = vsub.s32 %v53, %v1380
      %v1382 = vrot.slane %v1375, %v1381
      %v1383 = vlaneseq
      %v1384 = vshrl.u32 %v1383, 7
      %v1385 = vsub.s32 %v53, %v1384
      %v1386 = vrot.slane %v1378, %v1385
      %v1387 = vsel %vm62, %v1386, %v1382
      %v1389 = vsel %vm65, %v1387, 0.0
      %1390 = vadd.xlane.f32.xlu0 %v1389
      %v1391 = vpop.xlane.xlu0 %1390
      %vm1392 = vcmp.gt.f32.partialorder %v1391, 1.0
      %v1393 = vsel %vm1392, %v1355, %v1352
      %v1394 = vsel %vm1392, %v1353, %v1355
      %v1395 = vadd.f32 %v1393, %v1394
      %v1396 = vmul.f32 %v1395, 0.5
      %v1398 = vlaneseq
      %v1399 = vshrl.u32 %v1398, 7
      %v1400 = vsub.s32 0, %v1399
      %v1401 = vrot.slane %v1396, %v1400
      %v1402 = vlaneseq
      %v1403 = vshrl.u32 %v1402, 7
      %v1404 = vsub.s32 1, %v1403
      %v1405 = vrot.slane %v1396, %v1404
      %v1408 = vsub.f32 %v425, %v1401
      %v1409 = vsub.f32 %v426, %v1405
      %v1410 = vmax.f32 %v1408, 0.0
      %v1411 = vmax.f32 %v1409, 0.0
      %1414 = vset.pattern.permute.xlu0 0
      %1415 = vperm.xlu0 %1414, %v1410
      %v1416 = vpop.permute.xlu0 %1415
      %1417 = vset.pattern.permute.xlu0 0
      %1418 = vperm.xlu0 %1417, %v1411
      %v1419 = vpop.permute.xlu0 %1418
      %v1420 = vlaneseq
      %v1421 = vshrl.u32 %v1420, 7
      %v1422 = vsub.s32 %v53, %v1421
      %v1423 = vrot.slane %v1416, %v1422
      %v1424 = vlaneseq
      %v1425 = vshrl.u32 %v1424, 7
      %v1426 = vsub.s32 %v53, %v1425
      %v1427 = vrot.slane %v1419, %v1426
      %v1428 = vsel %vm62, %v1427, %v1423
      %v1430 = vsel %vm65, %v1428, 0.0
      %1431 = vadd.xlane.f32.xlu0 %v1430
      %v1432 = vpop.xlane.xlu0 %1431
      %vm1433 = vcmp.gt.f32.partialorder %v1432, 1.0
      %v1434 = vsel %vm1433, %v1396, %v1393
      %v1435 = vsel %vm1433, %v1394, %v1396
      %v1436 = vadd.f32 %v1434, %v1435
      %v1437 = vmul.f32 %v1436, 0.5
      %v1439 = vlaneseq
      %v1440 = vshrl.u32 %v1439, 7
      %v1441 = vsub.s32 0, %v1440
      %v1442 = vrot.slane %v1437, %v1441
      %v1443 = vlaneseq
      %v1444 = vshrl.u32 %v1443, 7
      %v1445 = vsub.s32 1, %v1444
      %v1446 = vrot.slane %v1437, %v1445
      %v1449 = vsub.f32 %v425, %v1442
      %v1450 = vsub.f32 %v426, %v1446
      %v1451 = vmax.f32 %v1449, 0.0
      %v1452 = vmax.f32 %v1450, 0.0
      %1455 = vset.pattern.permute.xlu0 0
      %1456 = vperm.xlu0 %1455, %v1451
      %v1457 = vpop.permute.xlu0 %1456
      %1458 = vset.pattern.permute.xlu0 0
      %1459 = vperm.xlu0 %1458, %v1452
      %v1460 = vpop.permute.xlu0 %1459
      %v1461 = vlaneseq
      %v1462 = vshrl.u32 %v1461, 7
      %v1463 = vsub.s32 %v53, %v1462
      %v1464 = vrot.slane %v1457, %v1463
      %v1465 = vlaneseq
      %v1466 = vshrl.u32 %v1465, 7
      %v1467 = vsub.s32 %v53, %v1466
      %v1468 = vrot.slane %v1460, %v1467
      %v1469 = vsel %vm62, %v1468, %v1464
      %v1471 = vsel %vm65, %v1469, 0.0
      %1472 = vadd.xlane.f32.xlu0 %v1471
      %v1473 = vpop.xlane.xlu0 %1472
      %vm1474 = vcmp.gt.f32.partialorder %v1473, 1.0
      %v1475 = vsel %vm1474, %v1437, %v1434
      %v1476 = vsel %vm1474, %v1435, %v1437
      %v1477 = vadd.f32 %v1475, %v1476
      %v1478 = vmul.f32 %v1477, 0.5
      %v1480 = vlaneseq
      %v1481 = vshrl.u32 %v1480, 7
      %v1482 = vsub.s32 0, %v1481
      %v1483 = vrot.slane %v1478, %v1482
      %v1484 = vlaneseq
      %v1485 = vshrl.u32 %v1484, 7
      %v1486 = vsub.s32 1, %v1485
      %v1487 = vrot.slane %v1478, %v1486
      %v1490 = vsub.f32 %v425, %v1483
      %v1491 = vsub.f32 %v426, %v1487
      %v1492 = vmax.f32 %v1490, 0.0
      %v1493 = vmax.f32 %v1491, 0.0
      %1496 = vset.pattern.permute.xlu0 0
      %1497 = vperm.xlu0 %1496, %v1492
      %v1498 = vpop.permute.xlu0 %1497
      %1499 = vset.pattern.permute.xlu0 0
      %1500 = vperm.xlu0 %1499, %v1493
      %v1501 = vpop.permute.xlu0 %1500
      %v1502 = vlaneseq
      %v1503 = vshrl.u32 %v1502, 7
      %v1504 = vsub.s32 %v53, %v1503
      %v1505 = vrot.slane %v1498, %v1504
      %v1506 = vlaneseq
      %v1507 = vshrl.u32 %v1506, 7
      %v1508 = vsub.s32 %v53, %v1507
      %v1509 = vrot.slane %v1501, %v1508
      %v1510 = vsel %vm62, %v1509, %v1505
      %v1512 = vsel %vm65, %v1510, 0.0
      %1513 = vadd.xlane.f32.xlu0 %v1512
      %v1514 = vpop.xlane.xlu0 %1513
      %vm1515 = vcmp.gt.f32.partialorder %v1514, 1.0
      %v1516 = vsel %vm1515, %v1478, %v1475
      %v1517 = vsel %vm1515, %v1476, %v1478
      %v1518 = vadd.f32 %v1516, %v1517
      %v1519 = vmul.f32 %v1518, 0.5
      %v1521 = vlaneseq
      %v1522 = vshrl.u32 %v1521, 7
      %v1523 = vsub.s32 0, %v1522
      %v1524 = vrot.slane %v1519, %v1523
      %v1525 = vlaneseq
      %v1526 = vshrl.u32 %v1525, 7
      %v1527 = vsub.s32 1, %v1526
      %v1528 = vrot.slane %v1519, %v1527
      %v1531 = vsub.f32 %v425, %v1524
      %v1532 = vsub.f32 %v426, %v1528
      %v1533 = vmax.f32 %v1531, 0.0
      %v1534 = vmax.f32 %v1532, 0.0
      %1537 = vset.pattern.permute.xlu0 0
      %1538 = vperm.xlu0 %1537, %v1533
      %v1539 = vpop.permute.xlu0 %1538
      %1540 = vset.pattern.permute.xlu0 0
      %1541 = vperm.xlu0 %1540, %v1534
      %v1542 = vpop.permute.xlu0 %1541
      %v1543 = vlaneseq
      %v1544 = vshrl.u32 %v1543, 7
      %v1545 = vsub.s32 %v53, %v1544
      %v1546 = vrot.slane %v1539, %v1545
      %v1547 = vlaneseq
      %v1548 = vshrl.u32 %v1547, 7
      %v1549 = vsub.s32 %v53, %v1548
      %v1550 = vrot.slane %v1542, %v1549
      %v1551 = vsel %vm62, %v1550, %v1546
      %v1553 = vsel %vm65, %v1551, 0.0
      %1554 = vadd.xlane.f32.xlu0 %v1553
      %v1555 = vpop.xlane.xlu0 %1554
      %vm1556 = vcmp.gt.f32.partialorder %v1555, 1.0
      %v1557 = vsel %vm1556, %v1519, %v1516
      %v1558 = vsel %vm1556, %v1517, %v1519
      %v1559 = vadd.f32 %v1557, %v1558
      %v1560 = vmul.f32 %v1559, 0.5
      %v1562 = vlaneseq
      %v1563 = vshrl.u32 %v1562, 7
      %v1564 = vsub.s32 0, %v1563
      %v1565 = vrot.slane %v1560, %v1564
      %v1566 = vlaneseq
      %v1567 = vshrl.u32 %v1566, 7
      %v1568 = vsub.s32 1, %v1567
      %v1569 = vrot.slane %v1560, %v1568
      %v1572 = vsub.f32 %v425, %v1565
      %v1573 = vsub.f32 %v426, %v1569
      %v1574 = vmax.f32 %v1572, 0.0
      %v1575 = vmax.f32 %v1573, 0.0
      %1578 = vset.pattern.permute.xlu0 0
      %1579 = vperm.xlu0 %1578, %v1574
      %v1580 = vpop.permute.xlu0 %1579
      %1581 = vset.pattern.permute.xlu0 0
      %1582 = vperm.xlu0 %1581, %v1575
      %v1583 = vpop.permute.xlu0 %1582
      %v1584 = vlaneseq
      %v1585 = vshrl.u32 %v1584, 7
      %v1586 = vsub.s32 %v53, %v1585
      %v1587 = vrot.slane %v1580, %v1586
      %v1588 = vlaneseq
      %v1589 = vshrl.u32 %v1588, 7
      %v1590 = vsub.s32 %v53, %v1589
      %v1591 = vrot.slane %v1583, %v1590
      %v1592 = vsel %vm62, %v1591, %v1587
      %v1594 = vsel %vm65, %v1592, 0.0
      %1595 = vadd.xlane.f32.xlu0 %v1594
      %v1596 = vpop.xlane.xlu0 %1595
      %vm1597 = vcmp.gt.f32.partialorder %v1596, 1.0
      %v1598 = vsel %vm1597, %v1560, %v1557
      %v1599 = vsel %vm1597, %v1558, %v1560
      %v1600 = vadd.f32 %v1598, %v1599
      %v1601 = vmul.f32 %v1600, 0.5
      %v1603 = vlaneseq
      %v1604 = vshrl.u32 %v1603, 7
      %v1605 = vsub.s32 0, %v1604
      %v1606 = vrot.slane %v1601, %v1605
      %v1607 = vlaneseq
      %v1608 = vshrl.u32 %v1607, 7
      %v1609 = vsub.s32 1, %v1608
      %v1610 = vrot.slane %v1601, %v1609
      %v1613 = vsub.f32 %v425, %v1606
      %v1614 = vsub.f32 %v426, %v1610
      %v1615 = vmax.f32 %v1613, 0.0
      %v1616 = vmax.f32 %v1614, 0.0
      %1619 = vset.pattern.permute.xlu0 0
      %1620 = vperm.xlu0 %1619, %v1615
      %v1621 = vpop.permute.xlu0 %1620
      %1622 = vset.pattern.permute.xlu0 0
      %1623 = vperm.xlu0 %1622, %v1616
      %v1624 = vpop.permute.xlu0 %1623
      %v1625 = vlaneseq
      %v1626 = vshrl.u32 %v1625, 7
      %v1627 = vsub.s32 %v53, %v1626
      %v1628 = vrot.slane %v1621, %v1627
      %v1629 = vlaneseq
      %v1630 = vshrl.u32 %v1629, 7
      %v1631 = vsub.s32 %v53, %v1630
      %v1632 = vrot.slane %v1624, %v1631
      %v1633 = vsel %vm62, %v1632, %v1628
      %v1635 = vsel %vm65, %v1633, 0.0
      %1636 = vadd.xlane.f32.xlu0 %v1635
      %v1637 = vpop.xlane.xlu0 %1636
      %vm1638 = vcmp.gt.f32.partialorder %v1637, 1.0
      %v1639 = vsel %vm1638, %v1601, %v1598
      %v1640 = vsel %vm1638, %v1599, %v1601
      %v1641 = vadd.f32 %v1639, %v1640
      %v1642 = vmul.f32 %v1641, 0.5
      %v1644 = vlaneseq
      %v1645 = vshrl.u32 %v1644, 7
      %v1646 = vsub.s32 0, %v1645
      %v1647 = vrot.slane %v1642, %v1646
      %v1648 = vlaneseq
      %v1649 = vshrl.u32 %v1648, 7
      %v1650 = vsub.s32 1, %v1649
      %v1651 = vrot.slane %v1642, %v1650
      %v1654 = vsub.f32 %v425, %v1647
      %v1655 = vsub.f32 %v426, %v1651
      %v1656 = vmax.f32 %v1654, 0.0
      %v1657 = vmax.f32 %v1655, 0.0
      %1660 = vset.pattern.permute.xlu0 0
      %1661 = vperm.xlu0 %1660, %v1656
      %v1662 = vpop.permute.xlu0 %1661
      %1663 = vset.pattern.permute.xlu0 0
      %1664 = vperm.xlu0 %1663, %v1657
      %v1665 = vpop.permute.xlu0 %1664
      %v1666 = vlaneseq
      %v1667 = vshrl.u32 %v1666, 7
      %v1668 = vsub.s32 %v53, %v1667
      %v1669 = vrot.slane %v1662, %v1668
      %v1670 = vlaneseq
      %v1671 = vshrl.u32 %v1670, 7
      %v1672 = vsub.s32 %v53, %v1671
      %v1673 = vrot.slane %v1665, %v1672
      %v1674 = vsel %vm62, %v1673, %v1669
      %v1676 = vsel %vm65, %v1674, 0.0
      %1677 = vadd.xlane.f32.xlu0 %v1676
      %v1678 = vpop.xlane.xlu0 %1677
      %vm1679 = vcmp.gt.f32.partialorder %v1678, 1.0
      %v1680 = vsel %vm1679, %v1642, %v1639
      %v1681 = vsel %vm1679, %v1640, %v1642
      %v1682 = vadd.f32 %v1680, %v1681
      %v1683 = vmul.f32 %v1682, 0.5
      %v1685 = vlaneseq
      %v1686 = vshrl.u32 %v1685, 7
      %v1687 = vsub.s32 0, %v1686
      %v1688 = vrot.slane %v1683, %v1687
      %v1689 = vlaneseq
      %v1690 = vshrl.u32 %v1689, 7
      %v1691 = vsub.s32 1, %v1690
      %v1692 = vrot.slane %v1683, %v1691
      %v1695 = vsub.f32 %v425, %v1688
      %v1696 = vsub.f32 %v426, %v1692
      %v1697 = vmax.f32 %v1695, 0.0
      %v1698 = vmax.f32 %v1696, 0.0
      %v1699 = vmul.f32 %v105, 4.0
      %v1700 = vmul.f32 %v1699, %v105
      %v1701 = vadd.f32 %v1700, 1.0
      %v1702 = vrsqrt.pop %v1701
      %v1703 = vmul.f32 %v1701, %v1702
      %vm1704 = vcmp.eq.f32.partialorder %v1701, inf
      %v1705 = vsel %vm1704, %v1701, %v1703
      %vm1706 = vcmp.eq.f32.partialorder %v1701, 0.0
      %v1707 = vand.u32 %v1701, 2147483648
      %v1708 = vsel %vm1706, %v1707, %v1705
      %v1709 = vadd.f32 %v1708, 1.0
      %v1710 = vmul.f32 %v1709, 0.5
      %v1711 = vsub.f32 %v105, 1.0
      %v1712 = vrcp.pop %v1710
      %v1713 = vmul.f32 %v1711, %v1712
      %v1714 = vsub.f32 %v1697, %v101
      %v1715 = vsub.f32 %v1698, %v102
      %v1716 = vmul.f32 %v1713, %v1714
      %v1717 = vmul.f32 %v1713, %v1715
      %v1718 = vadd.f32 %v1697, %v1716
      %v1719 = vadd.f32 %v1698, %v1717
    $region22: #{tpu_custom_call.1} parent=1 // loop_footer
      %s100 = sadd.s32 1, %s96
    $region23: #{tpu_custom_call.1} parent=1 // loop_footer_branch
      %95 = sbr.rel target = $region19
    $region24: #{tpu_custom_call.1} parent=1 // loop_exit
      _
    %1722 = vset.pattern.permute.xlu0 0
    %1723 = vperm.xlu0 %1722, %v101
    %v1724 = vpop.permute.xlu0 %1723
    %1725 = vset.pattern.permute.xlu0 0
    %1726 = vperm.xlu0 %1725, %v102
    %v1727 = vpop.permute.xlu0 %1726
    %v1728 = vlaneseq
    %v1729 = vshrl.u32 %v1728, 7
    %v1730 = vsub.s32 %v53, %v1729
    %v1731 = vrot.slane %v1724, %v1730
    %v1732 = vlaneseq
    %v1733 = vshrl.u32 %v1732, 7
    %v1734 = vsub.s32 %v53, %v1733
    %v1735 = vrot.slane %v1727, %v1734
    %v1736 = vsel %vm62, %v1735, %v1731
    %1738 = vst.msk [vmem:[#allocation7] sm:$0x3] %vm65, %v1736
    // Predicated region
    $region25: #{tpu_custom_call.1} parent=1 // pred_check
      _
    $region26: #{tpu_custom_call.1} parent=1 // pred_check_branch
      %1740 = sbr.rel (0) target = $region28
    $region27: #{tpu_custom_call.1} parent=1 // pred_region
      %s1742 = ssub.s32 32, 32
      %1743 = vsyncadd [#allocation4], %s1742
      %s1745 = sshll.u32 [#allocation7], 4
      %s1746 = int_to_ptr.vmem [resolvable:$true] %s1745
      %1748 = dma.vmem_to_hbm [thread:$0]  %s1746, 32, %s2, [#allocation4]
    $region28: #{tpu_custom_call.1} parent=1 // pred_fallthru
      _
    // Predicated region
    $region29: #{tpu_custom_call.1} parent=1 // pred_check
      _
    $region30: #{tpu_custom_call.1} parent=1 // pred_check_branch
      %1750 = sbr.rel (0) target = $region32
    $region31: #{tpu_custom_call.1} parent=1 // pred_region
      %1751 = dma.done [#allocation4], 32
    $region32: #{tpu_custom_call.1} parent=1 // pred_fallthru
      _
    %1752 = vsyncpa [#allocation3], 1
    %1753 = vsyncpa [#allocation6], 1
    %1754 = vsyncpa [#allocation4], 1

</llo_original>
